<compile_context>
chip_gen: v7x
topology: tpu7x:2x2x1
jax: 0.10.0
libtpu: 0.0.40
codegen_flags: <defaults>
</compile_context>

<pallas_src>
import functools

import jax
import jax.numpy as jnp
from jax.experimental import pallas as pl
from jax.experimental.pallas import tpu as pltpu


def attention_kernel(
    enc_ref,    # (1, bb, N, ENC)  encoder_out chunk
    h_ref,      # (1, bb, DEC)     decoder_hidden chunk
    wea_ref,    # (ENC, ATT)       encoder_att.weight.T
    wda_ref,    # (DEC, ATT)       decoder_att.weight.T
    bias_ref,   # (1, ATT)         encoder_att.bias + decoder_att.bias (folded)
    wfa_ref,    # (1, ATT)         full_att.weight (row)
    ctx_ref,    # (1, bb, ENC)
    alpha_ref,  # (1, bb, N)
    *,
    mxu_dtype,
):
    _, bb, n, enc_dim = enc_ref.shape
    att_dim = wea_ref.shape[1]

    enc = enc_ref[0]                                     # (bb, N, ENC) f32
    h = h_ref[0]                                         # (bb, DEC)    f32

    # One flattened MXU matmul over all bb*N rows of this chunk.
    enc_flat = enc.reshape(bb * n, enc_dim)              # (bb*N, ENC)
    att1 = jnp.dot(enc_flat.astype(mxu_dtype), wea_ref[...].astype(mxu_dtype),
                   preferred_element_type=jnp.float32)   # (bb*N, ATT) f32

    # Batched decoder projection (M = bb, not B separate M = 1 matmuls),
    # with the folded linear biases added once.
    att2b = jnp.dot(h.astype(mxu_dtype), wda_ref[...].astype(mxu_dtype),
                    preferred_element_type=jnp.float32) + bias_ref[...]  # (bb, ATT)

    t = jnp.tanh(att1.reshape(bb, n, att_dim) + att2b[:, None, :])       # (bb, N, ATT)

    # full_att (ATT -> 1) as VPU multiply + lane reduce; full_att bias omitted
    # (softmax over the pixel axis is shift-invariant).
    scores = jnp.sum(t * wfa_ref[...], axis=-1)                          # (bb, N)

    # Softmax over the pixel (lane) axis.
    m = jnp.max(scores, axis=-1, keepdims=True)                          # (bb, 1)
    e = jnp.exp(scores - m)                                              # (bb, N)
    denom = jnp.sum(e, axis=-1, keepdims=True)                           # (bb, 1)
    alpha = e * pl.reciprocal(denom, approx=True)                        # (bb, N)

    # Attention-weighted encoder features (VPU multiply + sublane reduce).
    ctx = jnp.sum(enc * alpha[..., None], axis=1)                        # (bb, ENC)

    ctx_ref[...] = ctx[None].astype(ctx_ref.dtype)                       # (1, bb, ENC)
    alpha_ref[...] = alpha[None].astype(alpha_ref.dtype)                 # (1, bb, N)


def attention_forward(prepared, encoder_out, decoder_hidden, *,
                      mxu_dtype=jnp.float32):
    """encoder_out: (B, N, ENC) f32; decoder_hidden: (B, DEC) f32.
    Returns (context (B, ENC), alpha (B, N)) — same as the PyTorch forward."""
    B, N, ENC = encoder_out.shape
    DEC = decoder_hidden.shape[-1]
    ATT = prepared["wea"].shape[1]

    # At most 2 grid steps: 2 "parallel" batch chunks keep both v7x TensorCores
    # busy while amortizing per-step overhead; 1 step if B is odd/tiny.
    G = 2 if (B >= 2 and B % 2 == 0) else 1
    bb = B // G

    enc4 = encoder_out.reshape(G, bb, N, ENC)
    h3 = decoder_hidden.reshape(G, bb, DEC)

    kernel = functools.partial(attention_kernel, mxu_dtype=mxu_dtype)

    grid_spec = pltpu.PrefetchScalarGridSpec(
        num_scalar_prefetch=0,
        grid=(G,),
        in_specs=[
            pl.BlockSpec((1, bb, N, ENC), lambda g: (g, 0, 0, 0)),
            pl.BlockSpec((1, bb, DEC), lambda g: (g, 0, 0)),
            pl.BlockSpec((ENC, ATT), lambda g: (0, 0)),
            pl.BlockSpec((DEC, ATT), lambda g: (0, 0)),
            pl.BlockSpec((1, ATT), lambda g: (0, 0)),
            pl.BlockSpec((1, ATT), lambda g: (0, 0)),
        ],
        out_specs=[
            pl.BlockSpec((1, bb, ENC), lambda g: (g, 0, 0)),
            pl.BlockSpec((1, bb, N), lambda g: (g, 0, 0)),
        ],
    )

    ctx3, alpha3 = pl.pallas_call(
        kernel,
        out_shape=(
            jax.ShapeDtypeStruct((G, bb, ENC), jnp.float32),
            jax.ShapeDtypeStruct((G, bb, N), jnp.float32),
        ),
        grid_spec=grid_spec,
        compiler_params=pltpu.CompilerParams(dimension_semantics=("parallel",)),
    )(enc4, h3, prepared["wea"], prepared["wda"], prepared["bias"],
      prepared["wfa_row"])

    return ctx3.reshape(B, ENC), alpha3.reshape(B, N)


def prepare_attention_params(params):
    """Transpose weights / fold biases ONCE (not per forward call)."""
    return {
        "wea": params["enc_att_w"].T,                                    # (ENC, ATT)
        "wda": params["dec_att_w"].T,                                    # (DEC, ATT)
        "bias": (params["enc_att_b"] + params["dec_att_b"])[None, :],    # (1, ATT)
        "wfa_row": params["full_att_w"],                                 # (1, ATT)
        # full_att bias dropped: softmax over pixels is shift-invariant.
    }


def init_params(key, encoder_dim, decoder_dim, attention_dim):
    """nn.Linear-style init: U(-1/sqrt(fan_in), 1/sqrt(fan_in)), torch layout."""
    keys = jax.random.split(key, 6)

    def unif(k, shape, fan_in):
        bound = float(fan_in) ** -0.5
        return jax.random.uniform(k, shape, jnp.float32, minval=-bound, maxval=bound)

    p = {}
    p["enc_att_w"] = unif(keys[0], (attention_dim, encoder_dim), encoder_dim)
    p["enc_att_b"] = unif(keys[1], (attention_dim,), encoder_dim)
    p["dec_att_w"] = unif(keys[2], (attention_dim, decoder_dim), decoder_dim)
    p["dec_att_b"] = unif(keys[3], (attention_dim,), decoder_dim)
    p["full_att_w"] = unif(keys[4], (1, attention_dim), attention_dim)
    p["full_att_b"] = unif(keys[5], (1,), attention_dim)
    return p


def attention_reference(params, encoder_out, decoder_hidden):
    """Pure-JAX reference mirroring the PyTorch forward exactly (incl. bfa)."""
    att1 = encoder_out @ params["enc_att_w"].T + params["enc_att_b"]
    att2 = (decoder_hidden @ params["dec_att_w"].T + params["dec_att_b"])[:, None, :]
    att = (jnp.tanh(att1 + att2) @ params["full_att_w"].T + params["full_att_b"])[..., 0]
    alpha = jax.nn.softmax(att, axis=1)
    context = (encoder_out * alpha[..., None]).sum(axis=1)
    return context, alpha


if __name__ == "__main__":
    B, N = 4, 64                        # batch, num_pixels
    encoder_dim, decoder_dim, attention_dim = 256, 128, 128

    key = jax.random.PRNGKey(0)
    kp, ke, kh = jax.random.split(key, 3)
    params = init_params(kp, encoder_dim, decoder_dim, attention_dim)
    prepared = prepare_attention_params(params)   # transpose / fold once

    encoder_out = jax.random.normal(ke, (B, N, encoder_dim), jnp.float32)
    decoder_hidden = jax.random.normal(kh, (B, decoder_dim), jnp.float32)

    ctx_ref, alpha_ref = attention_reference(params, encoder_out, decoder_hidden)

    # f32 MXU-operand path (bit-faithful to the reference, tight tolerance).
    ctx, alpha = attention_forward(prepared, encoder_out, decoder_hidden)
    ctx, alpha = jax.block_until_ready((ctx, alpha))
    assert ctx.shape == (B, encoder_dim), ctx.shape
    assert alpha.shape == (B, N), alpha.shape
    if not (jnp.allclose(ctx, ctx_ref, atol=1e-3, rtol=1e-3)
            and jnp.allclose(alpha, alpha_ref, atol=1e-3, rtol=1e-3)):
        raise AssertionError(
            "f32 path mismatch: ctx %.3e alpha %.3e" % (
                float(jnp.max(jnp.abs(ctx - ctx_ref))),
                float(jnp.max(jnp.abs(alpha - alpha_ref)))))

    # bf16 MXU-operand path (v5e/v6e throughput), f32 accumulation — looser tol.
    ctx_bf, alpha_bf = attention_forward(prepared, encoder_out, decoder_hidden,
                                         mxu_dtype=jnp.bfloat16)
    ctx_bf, alpha_bf = jax.block_until_ready((ctx_bf, alpha_bf))
    if not (jnp.allclose(ctx_bf, ctx_ref, atol=3e-2, rtol=3e-2)
            and jnp.allclose(alpha_bf, alpha_ref, atol=3e-2, rtol=3e-2)):
        raise AssertionError(
            "bf16 path mismatch: ctx %.3e alpha %.3e" % (
                float(jnp.max(jnp.abs(ctx_bf - ctx_ref))),
                float(jnp.max(jnp.abs(alpha_bf - alpha_ref)))))

    print("KERNEL_OK")
</pallas_src>

<mosaic_0001>
module attributes {stable_mosaic.version = 11 : i64} {
  func.func @attention_kernel(%arg0: i32, %arg1: memref<1x2x64x256xf32, #tpu.memory_space<vmem>>, %arg2: memref<1x2x128xf32, #tpu.memory_space<vmem>>, %arg3: memref<256x128xf32, #tpu.memory_space<vmem>>, %arg4: memref<128x128xf32, #tpu.memory_space<vmem>>, %arg5: memref<1x128xf32, #tpu.memory_space<vmem>>, %arg6: memref<1x128xf32, #tpu.memory_space<vmem>>, %arg7: memref<1x2x256xf32, #tpu.memory_space<vmem>>, %arg8: memref<1x2x64xf32, #tpu.memory_space<vmem>>) attributes {dimension_semantics = [#tpu.dimension_semantics<parallel>], iteration_bounds = array<i64: 2>, scalar_prefetch = 0 : i64, scratch_operands = 0 : i64, tpu.core_type = #tpu.core_type<tc>, window_params = [{transform_indices = @transform_0, window_bounds = array<i64: 1, 2, 64, 256>}, {transform_indices = @transform_1, window_bounds = array<i64: 1, 2, 128>}, {pipeline_mode = #tpu.pipeline_mode<synchronous>, transform_indices = @transform_2, window_bounds = array<i64: 256, 128>}, {pipeline_mode = #tpu.pipeline_mode<synchronous>, transform_indices = @transform_3, window_bounds = array<i64: 128, 128>}, {pipeline_mode = #tpu.pipeline_mode<synchronous>, transform_indices = @transform_4, window_bounds = array<i64: 1, 128>}, {pipeline_mode = #tpu.pipeline_mode<synchronous>, transform_indices = @transform_5, window_bounds = array<i64: 1, 128>}, {transform_indices = @transform_6, window_bounds = array<i64: 1, 2, 256>}, {transform_indices = @transform_7, window_bounds = array<i64: 1, 2, 64>}]} {
    %c0 = arith.constant 0 : index
    %c0_0 = arith.constant 0 : index
    %c0_1 = arith.constant 0 : index
    %c0_2 = arith.constant 0 : index
    %0 = vector.load %arg1[%c0, %c0_0, %c0_1, %c0_2] : memref<1x2x64x256xf32, #tpu.memory_space<vmem>>, vector<1x2x64x256xf32>
    %1 = vector.shape_cast %0 : vector<1x2x64x256xf32> to vector<2x64x256xf32>
    %c0_3 = arith.constant 0 : index
    %c0_4 = arith.constant 0 : index
    %c0_5 = arith.constant 0 : index
    %2 = vector.load %arg2[%c0_3, %c0_4, %c0_5] : memref<1x2x128xf32, #tpu.memory_space<vmem>>, vector<1x2x128xf32>
    %3 = vector.shape_cast %2 : vector<1x2x128xf32> to vector<2x128xf32>
    %4 = vector.shape_cast %1 : vector<2x64x256xf32> to vector<128x256xf32>
    %c0_6 = arith.constant 0 : index
    %c0_7 = arith.constant 0 : index
    %5 = vector.load %arg3[%c0_6, %c0_7] : memref<256x128xf32, #tpu.memory_space<vmem>>, vector<256x128xf32>
    %cst = arith.constant dense<0.000000e+00> : vector<128x128xf32>
    %6 = tpu.matmul %4, %5, %cst {dimension_numbers = #tpu.dot_dimension_numbers<[1], [0], [0], [1], [0, 0, 1, 1], [], []>} : vector<128x256xf32>, vector<256x128xf32>, vector<128x128xf32> -> vector<128x128xf32>
    %c0_8 = arith.constant 0 : index
    %c0_9 = arith.constant 0 : index
    %7 = vector.load %arg4[%c0_8, %c0_9] : memref<128x128xf32, #tpu.memory_space<vmem>>, vector<128x128xf32>
    %cst_10 = arith.constant dense<0.000000e+00> : vector<2x128xf32>
    %8 = tpu.matmul %3, %7, %cst_10 {dimension_numbers = #tpu.dot_dimension_numbers<[1], [0], [0], [1], [0, 0, 1, 1], [], []>} : vector<2x128xf32>, vector<128x128xf32>, vector<2x128xf32> -> vector<2x128xf32>
    %c0_11 = arith.constant 0 : index
    %c0_12 = arith.constant 0 : index
    %9 = vector.load %arg5[%c0_11, %c0_12] : memref<1x128xf32, #tpu.memory_space<vmem>>, vector<1x128xf32>
    %10 = vector.broadcast %9 : vector<1x128xf32> to vector<2x128xf32>
    %11 = arith.addf %8, %10 : vector<2x128xf32>
    %12 = vector.shape_cast %6 : vector<128x128xf32> to vector<2x64x128xf32>
    %13 = vector.shape_cast %11 : vector<2x128xf32> to vector<2x1x128xf32>
    %14 = vector.broadcast %13 : vector<2x1x128xf32> to vector<2x64x128xf32>
    %15 = arith.addf %12, %14 : vector<2x64x128xf32>
    %16 = math.tanh %15 : vector<2x64x128xf32>
    %c0_13 = arith.constant 0 : index
    %c0_14 = arith.constant 0 : index
    %17 = vector.load %arg6[%c0_13, %c0_14] : memref<1x128xf32, #tpu.memory_space<vmem>>, vector<1x128xf32>
    %18 = vector.shape_cast %17 : vector<1x128xf32> to vector<1x1x128xf32>
    %19 = vector.broadcast %18 : vector<1x1x128xf32> to vector<2x64x128xf32>
    %20 = arith.mulf %16, %19 : vector<2x64x128xf32>
    %cst_15 = arith.constant dense<0.000000e+00> : vector<2x64xf32>
    %21 = vector.multi_reduction <add>, %20, %cst_15 [2] : vector<2x64x128xf32> to vector<2x64xf32>
    %cst_16 = arith.constant dense<0xFF800000> : vector<2xf32>
    %22 = vector.multi_reduction <maximumf>, %21, %cst_16 [1] : vector<2x64xf32> to vector<2xf32>
    %23 = vector.shape_cast %22 : vector<2xf32> to vector<2x1xf32>
    %24 = vector.broadcast %23 : vector<2x1xf32> to vector<2x64xf32>
    %25 = arith.subf %21, %24 : vector<2x64xf32>
    %26 = math.exp %25 : vector<2x64xf32>
    %cst_17 = arith.constant dense<0.000000e+00> : vector<2xf32>
    %27 = vector.multi_reduction <add>, %26, %cst_17 [1] : vector<2x64xf32> to vector<2xf32>
    %28 = vector.shape_cast %27 : vector<2xf32> to vector<2x1xf32>
    %29 = tpu.reciprocal %28 {approx = true} : vector<2x1xf32> -> vector<2x1xf32>
    %30 = vector.broadcast %29 : vector<2x1xf32> to vector<2x64xf32>
    %31 = arith.mulf %26, %30 : vector<2x64xf32>
    %32 = vector.shape_cast %31 : vector<2x64xf32> to vector<2x64x1xf32>
    %33 = vector.broadcast %32 : vector<2x64x1xf32> to vector<2x64x256xf32>
    %34 = arith.mulf %1, %33 : vector<2x64x256xf32>
    %cst_18 = arith.constant dense<0.000000e+00> : vector<2x256xf32>
    %35 = vector.multi_reduction <add>, %34, %cst_18 [1] : vector<2x64x256xf32> to vector<2x256xf32>
    %36 = vector.shape_cast %35 : vector<2x256xf32> to vector<1x2x256xf32>
    %c0_19 = arith.constant 0 : index
    %c0_20 = arith.constant 0 : index
    %c0_21 = arith.constant 0 : index
    %37 = vector.load %arg7[%c0_19, %c0_20, %c0_21] : memref<1x2x256xf32, #tpu.memory_space<vmem>>, vector<1x2x256xf32>
    tpu.vector_store %arg7[%c0_19, %c0_20, %c0_21], %36 {strides = array<i32>} : memref<1x2x256xf32, #tpu.memory_space<vmem>>, vector<1x2x256xf32>,
    %38 = vector.shape_cast %31 : vector<2x64xf32> to vector<1x2x64xf32>
    %c0_22 = arith.constant 0 : index
    %c0_23 = arith.constant 0 : index
    %c0_24 = arith.constant 0 : index
    %39 = vector.load %arg8[%c0_22, %c0_23, %c0_24] : memref<1x2x64xf32, #tpu.memory_space<vmem>>, vector<1x2x64xf32>
    tpu.vector_store %arg8[%c0_22, %c0_23, %c0_24], %38 {strides = array<i32>} : memref<1x2x64xf32, #tpu.memory_space<vmem>>, vector<1x2x64xf32>,
    return
  }
  func.func @transform_0(%arg0: i32) -> (i32, i32, i32, i32) {
    %c0_i32 = arith.constant 0 : i32
    %c0_i32_0 = arith.constant 0 : i32
    %c0_i32_1 = arith.constant 0 : i32
    %c0_i32_2 = arith.constant 0 : i32
    return %arg0, %c0_i32, %c0_i32_0, %c0_i32_1 : i32, i32, i32, i32
  }
  func.func @transform_1(%arg0: i32) -> (i32, i32, i32) {
    %c0_i32 = arith.constant 0 : i32
    %c0_i32_0 = arith.constant 0 : i32
    %c0_i32_1 = arith.constant 0 : i32
    return %arg0, %c0_i32, %c0_i32_0 : i32, i32, i32
  }
  func.func @transform_2(%arg0: i32) -> (i32, i32) {
    %c0_i32 = arith.constant 0 : i32
    %c0_i32_0 = arith.constant 0 : i32
    %c0_i32_1 = arith.constant 0 : i32
    return %c0_i32, %c0_i32_0 : i32, i32
  }
  func.func @transform_3(%arg0: i32) -> (i32, i32) {
    %c0_i32 = arith.constant 0 : i32
    %c0_i32_0 = arith.constant 0 : i32
    %c0_i32_1 = arith.constant 0 : i32
    return %c0_i32, %c0_i32_0 : i32, i32
  }
  func.func @transform_4(%arg0: i32) -> (i32, i32) {
    %c0_i32 = arith.constant 0 : i32
    %c0_i32_0 = arith.constant 0 : i32
    %c0_i32_1 = arith.constant 0 : i32
    return %c0_i32, %c0_i32_0 : i32, i32
  }
  func.func @transform_5(%arg0: i32) -> (i32, i32) {
    %c0_i32 = arith.constant 0 : i32
    %c0_i32_0 = arith.constant 0 : i32
    %c0_i32_1 = arith.constant 0 : i32
    return %c0_i32, %c0_i32_0 : i32, i32
  }
  func.func @transform_6(%arg0: i32) -> (i32, i32, i32) {
    %c0_i32 = arith.constant 0 : i32
    %c0_i32_0 = arith.constant 0 : i32
    %c0_i32_1 = arith.constant 0 : i32
    return %arg0, %c0_i32, %c0_i32_0 : i32, i32, i32
  }
  func.func @transform_7(%arg0: i32) -> (i32, i32, i32) {
    %c0_i32 = arith.constant 0 : i32
    %c0_i32_0 = arith.constant 0 : i32
    %c0_i32_1 = arith.constant 0 : i32
    return %arg0, %c0_i32, %c0_i32_0 : i32, i32, i32
  }
}

</mosaic_0001>

<llo_original>
// kernel: tpu_custom_call.1
$region0: #{tpu_custom_call.1}
  #allocation0 [shape = 'u32[]', space=smem, size = 0x4, offset = 0x4, fixed_abs, tag = 'smem constant byte address 0x4 - core index']
  #allocation1 [shape = 'u32[144,128]{1,0:T(1,128)}', space=vmem, size = 0x12000, scoped, tag = 'internal scratch']
  %s0 = inlined_call_operand.hbm [shape: f32[2,2,64,256], index: 0, kind: input, shape index: {}]
  %s1 = inlined_call_operand.hbm [shape: f32[2,2,128], index: 1, kind: input, shape index: {}]
  %s2 = inlined_call_operand.hbm [shape: f32[256,128], index: 2, kind: input, shape index: {}]
  %s3 = inlined_call_operand.hbm [shape: f32[128,128], index: 3, kind: input, shape index: {}]
  %s4 = inlined_call_operand.vmem [shape: f32[1,128], index: 4, kind: input, shape index: {}]
  %s5 = inlined_call_operand.vmem [shape: f32[1,128], index: 5, kind: input, shape index: {}]
  %s6 = inlined_call_operand.hbm [shape: f32[2,2,256], index: 6, kind: output, shape index: {0}]
  %s7 = inlined_call_operand.hbm [shape: f32[2,2,64], index: 7, kind: output, shape index: {1}]
  %8 = xla_tuple %s6, %s7
  %s9 = sld [smem:[#allocation0]]
  $region81: #{tpu_custom_call.1} parent=0
    _
  %s11 = ssub.s32 1, %s9
  %s12 = scalar_select 0, %s11, %s9
  $region1: #{tpu_custom_call.1} parent=0
    #allocation2 [shape = 'u8[262144]{0}', space=vmem, size = 0x40000, scoped, tag = 'input window, operand 0']
    #allocation3 [shape = 's32[2]{0}', space=sflag, size = 0x8, scoped, tag = 'scoped memory for tpu_custom_call.1']
    #allocation4 [shape = 's32[2]{0}', space=sflag, size = 0x8, scoped, tag = 'scoped memory for tpu_custom_call.1']
    #allocation5 [shape = 'u8[2048]{0}', space=vmem, size = 0x800, scoped, tag = 'input window, operand 1']
    #allocation6 [shape = 's32[2]{0}', space=sflag, size = 0x8, scoped, tag = 'scoped memory for tpu_custom_call.1']
    #allocation7 [shape = 'u8[131072]{0}', space=vmem, size = 0x20000, scoped, tag = 'input window, operand 2, single buffered']
    #allocation8 [shape = 'u8[65536]{0}', space=vmem, size = 0x10000, scoped, tag = 'input window, operand 3, single buffered']
    #allocation9 [shape = 's32[1]{0}', space=sflag, size = 0x4, scoped, tag = 'scoped memory for tpu_custom_call.1']
    #allocation10 [shape = 'u8[4096]{0}', space=vmem, size = 0x1000, scoped, tag = 'output window, operand 0']
    #allocation11 [shape = 'u8[2048]{0}', space=vmem, size = 0x800, scoped, tag = 'output window, operand 1']
    #allocation12 [shape = 's32[2]{0}', space=sflag, size = 0x8, scoped, tag = 'scoped memory for tpu_custom_call.1']
    %13 = vsyncpa [#allocation3], 0
    %s14 = scalar_lea.sflag [#allocation3], 1
    %15 = vsyncpa %s14, 0
    %16 = vsyncpa [#allocation6], 0
    %s17 = scalar_lea.sflag [#allocation6], 1
    %18 = vsyncpa %s17, 0
    %19 = vsyncpa [#allocation9], 0
    %20 = vsyncpa [#allocation4], 0
    %s21 = scalar_lea.sflag [#allocation4], 1
    %22 = vsyncpa %s21, 0
    %23 = vsyncpa [#allocation12], 0
    %s24 = scalar_lea.sflag [#allocation12], 1
    %25 = vsyncpa %s24, 0
    loop: start=0, step=1, limit=4
    $region2: #{tpu_custom_call.1} parent=1 // loop_pre_header
      _
    $region3: #{tpu_custom_call.1} parent=1 // loop_header
      %s27 = sphi 0, %s31
      %p28 = scmp.ge.s32.totalorder %s27, 4
      %s37 = sphi 0, %s39
      %s40 = sphi 0, %s37
      %s41 = sphi 0, %s40
      %s57 = sphi 0, %s41
      %s63 = sphi 0, %s65
      %s66 = sphi 0, %s63
      %s67 = sphi 0, %s66
      %s83 = sphi 0, %s67
      %s87 = sphi 0, %s87
      %s89 = sphi 0, %s87
      %s90 = sphi 0, %s89
      %s104 = sphi 0, %s90
      %s108 = sphi 0, %s108
      %s110 = sphi 0, %s108
      %s111 = sphi 0, %s110
      %s125 = sphi 0, %s111
      %s129 = sphi 0, %s129
      %s131 = sphi 0, %s129
      %s132 = sphi 0, %s131
      %s146 = sphi 0, %s132
      %s150 = sphi 0, %s150
      %s152 = sphi 0, %s150
      %s153 = sphi 0, %s152
      %s167 = sphi 0, %s153
      %s173 = sphi 0, %s175
      %s176 = sphi 0, %s173
      %s177 = sphi 0, %s176
      %s193 = sphi 0, %s177
      %s199 = sphi 0, %s201
      %s202 = sphi 0, %s199
      %s203 = sphi 0, %s202
      %s219 = sphi 0, %s203
    $region4: #{tpu_custom_call.1} parent=1 // loop_header_branch
      %30 = sbr.rel (%p28) target = $region8
    $region5: #{tpu_custom_call.1} parent=1 // loop_body
      %s32 = ssub.s32 %s27, 1
      %s33 = ssub.s32 %s27, 2
      %s34 = sadd.s32 %s27, 1
      %s35 = ssub.s32 %s27, %s34
      %p36 = scmp.eq.s32.totalorder %s35, 0
      %s38 = sadd.s32 %s37, 1
      %s39 = scalar_select %p36, %s37, %s38
      %p42 = pneg %p36
      %p43 = scmp.eq.s32.totalorder %s27, 1
      %p44 = por %p42, %p43
      %p45 = scmp.ne.s32.totalorder %s37, %s40
      %p46 = scmp.eq.s32.totalorder %s27, 0
      %p47 = por %p45, %p46
      %p48 = scmp.ne.s32.totalorder %s37, %s40
      %p49 = scmp.eq.s32.totalorder %s32, 1
      %p50 = por %p48, %p49
      %p51 = scmp.ne.s32.totalorder %s40, %s41
      %p52 = scmp.eq.s32.totalorder %s32, 0
      %p53 = por %p51, %p52
      %p54 = scmp.ne.s32.totalorder %s40, %s41
      %p55 = scmp.eq.s32.totalorder %s33, 1
      %p56 = por %p54, %p55
      %p58 = scmp.ne.s32.totalorder %s41, %s57
      %p59 = scmp.eq.s32.totalorder %s33, 0
      %p60 = por %p58, %p59
      %s61 = ssub.s32 %s27, %s34
      %p62 = scmp.eq.s32.totalorder %s61, 0
      %s64 = sadd.s32 %s63, 1
      %s65 = scalar_select %p62, %s63, %s64
      %p68 = pneg %p62
      %p69 = scmp.eq.s32.totalorder %s27, 1
      %p70 = por %p68, %p69
      %p71 = scmp.ne.s32.totalorder %s63, %s66
      %p72 = scmp.eq.s32.totalorder %s27, 0
      %p73 = por %p71, %p72
      %p74 = scmp.ne.s32.totalorder %s63, %s66
      %p75 = scmp.eq.s32.totalorder %s32, 1
      %p76 = por %p74, %p75
      %p77 = scmp.ne.s32.totalorder %s66, %s67
      %p78 = scmp.eq.s32.totalorder %s32, 0
      %p79 = por %p77, %p78
      %p80 = scmp.ne.s32.totalorder %s66, %s67
      %p81 = scmp.eq.s32.totalorder %s33, 1
      %p82 = por %p80, %p81
      %p84 = scmp.ne.s32.totalorder %s67, %s83
      %p85 = scmp.eq.s32.totalorder %s33, 0
      %p86 = por %p84, %p85
      %s88 = sadd.s32 %s87, 1
      %p91 = scmp.eq.s32.totalorder %s27, 1
      %p92 = scmp.ne.s32.totalorder %s87, %s89
      %p93 = scmp.eq.s32.totalorder %s27, 0
      %p94 = por %p92, %p93
      %p95 = scmp.ne.s32.totalorder %s87, %s89
      %p96 = scmp.eq.s32.totalorder %s32, 1
      %p97 = por %p95, %p96
      %p98 = scmp.ne.s32.totalorder %s89, %s90
      %p99 = scmp.eq.s32.totalorder %s32, 0
      %p100 = por %p98, %p99
      %p101 = scmp.ne.s32.totalorder %s89, %s90
      %p102 = scmp.eq.s32.totalorder %s33, 1
      %p103 = por %p101, %p102
      %p105 = scmp.ne.s32.totalorder %s90, %s104
      %p106 = scmp.eq.s32.totalorder %s33, 0
      %p107 = por %p105, %p106
      %s109 = sadd.s32 %s108, 1
      %p112 = scmp.eq.s32.totalorder %s27, 1
      %p113 = scmp.ne.s32.totalorder %s108, %s110
      %p114 = scmp.eq.s32.totalorder %s27, 0
      %p115 = por %p113, %p114
      %p116 = scmp.ne.s32.totalorder %s108, %s110
      %p117 = scmp.eq.s32.totalorder %s32, 1
      %p118 = por %p116, %p117
      %p119 = scmp.ne.s32.totalorder %s110, %s111
      %p120 = scmp.eq.s32.totalorder %s32, 0
      %p121 = por %p119, %p120
      %p122 = scmp.ne.s32.totalorder %s110, %s111
      %p123 = scmp.eq.s32.totalorder %s33, 1
      %p124 = por %p122, %p123
      %p126 = scmp.ne.s32.totalorder %s111, %s125
      %p127 = scmp.eq.s32.totalorder %s33, 0
      %p128 = por %p126, %p127
      %s130 = sadd.s32 %s129, 1
      %p133 = scmp.eq.s32.totalorder %s27, 1
      %p134 = scmp.ne.s32.totalorder %s129, %s131
      %p135 = scmp.eq.s32.totalorder %s27, 0
      %p136 = por %p134, %p135
      %p137 = scmp.ne.s32.totalorder %s129, %s131
      %p138 = scmp.eq.s32.totalorder %s32, 1
      %p139 = por %p137, %p138
      %p140 = scmp.ne.s32.totalorder %s131, %s132
      %p141 = scmp.eq.s32.totalorder %s32, 0
      %p142 = por %p140, %p141
      %p143 = scmp.ne.s32.totalorder %s131, %s132
      %p144 = scmp.eq.s32.totalorder %s33, 1
      %p145 = por %p143, %p144
      %p147 = scmp.ne.s32.totalorder %s132, %s146
      %p148 = scmp.eq.s32.totalorder %s33, 0
      %p149 = por %p147, %p148
      %s151 = sadd.s32 %s150, 1
      %p154 = scmp.eq.s32.totalorder %s27, 1
      %p155 = scmp.ne.s32.totalorder %s150, %s152
      %p156 = scmp.eq.s32.totalorder %s27, 0
      %p157 = por %p155, %p156
      %p158 = scmp.ne.s32.totalorder %s150, %s152
      %p159 = scmp.eq.s32.totalorder %s32, 1
      %p160 = por %p158, %p159
      %p161 = scmp.ne.s32.totalorder %s152, %s153
      %p162 = scmp.eq.s32.totalorder %s32, 0
      %p163 = por %p161, %p162
      %p164 = scmp.ne.s32.totalorder %s152, %s153
      %p165 = scmp.eq.s32.totalorder %s33, 1
      %p166 = por %p164, %p165
      %p168 = scmp.ne.s32.totalorder %s153, %s167
      %p169 = scmp.eq.s32.totalorder %s33, 0
      %p170 = por %p168, %p169
      %s171 = ssub.s32 %s27, %s34
      %p172 = scmp.eq.s32.totalorder %s171, 0
      %s174 = sadd.s32 %s173, 1
      %s175 = scalar_select %p172, %s173, %s174
      %p178 = pneg %p172
      %p179 = scmp.eq.s32.totalorder %s27, 1
      %p180 = por %p178, %p179
      %p181 = scmp.ne.s32.totalorder %s173, %s176
      %p182 = scmp.eq.s32.totalorder %s27, 0
      %p183 = por %p181, %p182
      %p184 = scmp.ne.s32.totalorder %s173, %s176
      %p185 = scmp.eq.s32.totalorder %s32, 1
      %p186 = por %p184, %p185
      %p187 = scmp.ne.s32.totalorder %s176, %s177
      %p188 = scmp.eq.s32.totalorder %s32, 0
      %p189 = por %p187, %p188
      %p190 = scmp.ne.s32.totalorder %s176, %s177
      %p191 = scmp.eq.s32.totalorder %s33, 1
      %p192 = por %p190, %p191
      %p194 = scmp.ne.s32.totalorder %s177, %s193
      %p195 = scmp.eq.s32.totalorder %s33, 0
      %p196 = por %p194, %p195
      %s197 = ssub.s32 %s27, %s34
      %p198 = scmp.eq.s32.totalorder %s197, 0
      %s200 = sadd.s32 %s199, 1
      %s201 = scalar_select %p198, %s199, %s200
      %p204 = pneg %p198
      %p205 = scmp.eq.s32.totalorder %s27, 1
      %p206 = por %p204, %p205
      %p207 = scmp.ne.s32.totalorder %s199, %s202
      %p208 = scmp.eq.s32.totalorder %s27, 0
      %p209 = por %p207, %p208
      %p210 = scmp.ne.s32.totalorder %s199, %s202
      %p211 = scmp.eq.s32.totalorder %s32, 1
      %p212 = por %p210, %p211
      %p213 = scmp.ne.s32.totalorder %s202, %s203
      %p214 = scmp.eq.s32.totalorder %s32, 0
      %p215 = por %p213, %p214
      %p216 = scmp.ne.s32.totalorder %s202, %s203
      %p217 = scmp.eq.s32.totalorder %s33, 1
      %p218 = por %p216, %p217
      %p220 = scmp.ne.s32.totalorder %s203, %s219
      %p221 = scmp.eq.s32.totalorder %s33, 0
      %p222 = por %p220, %p221
      %p223 = scmp.le.s32.totalorder 1, %s27
      %p224 = scmp.lt.s32.totalorder %s27, 3
      %p225 = pnand %p223, %p224
      %p226 = pneg %p225
      // Predicated region
      $region9: #{tpu_custom_call.1} parent=5 // pred_check
        _
      $region10: #{tpu_custom_call.1} parent=5 // pred_check_branch
        %228 = sbr.rel (%p225) target = $region12
      $region11: #{tpu_custom_call.1} parent=5 // pred_region
        %s229 = ssub.s32 %s27, 1
        // Predicated region
        $region13: #{tpu_custom_call.1} parent=11 // pred_check
          %p230 = pneg %p100
        $region14: #{tpu_custom_call.1} parent=11 // pred_check_branch
          %232 = sbr.rel (%p230) target = $region16
        $region15: #{tpu_custom_call.1} parent=11 // pred_region
          %s234 = ssub.s32 4096, 4096
          %235 = vsyncadd [#allocation6], %s234
          %s236 = sshll.u32 [#allocation7], 4
          %s237 = int_to_ptr.vmem [resolvable:$true] %s236
          %242 = dma.hbm_to_vmem [thread:$0]  %s2, 4096, %s237, [#allocation6], 128, 128, 8
        $region16: #{tpu_custom_call.1} parent=11 // pred_fallthru
          _
        // Predicated region
        $region17: #{tpu_custom_call.1} parent=11 // pred_check
          %p243 = pneg %p121
        $region18: #{tpu_custom_call.1} parent=11 // pred_check_branch
          %245 = sbr.rel (%p243) target = $region20
        $region19: #{tpu_custom_call.1} parent=11 // pred_region
          %s247 = ssub.s32 2048, 2048
          %248 = vsyncadd [#allocation9], %s247
          %s249 = sshll.u32 [#allocation8], 4
          %s250 = int_to_ptr.vmem [resolvable:$true] %s249
          %255 = dma.hbm_to_vmem [thread:$0]  %s3, 2048, %s250, [#allocation9], 128, 128, 8
        $region20: #{tpu_custom_call.1} parent=11 // pred_fallthru
          _
        // Predicated region
        $region21: #{tpu_custom_call.1} parent=11 // pred_check
          %p256 = pneg %p142
        $region22: #{tpu_custom_call.1} parent=11 // pred_check_branch
          %258 = sbr.rel (%p256) target = $region24
        $region23: #{tpu_custom_call.1} parent=11 // pred_region
          _
        $region24: #{tpu_custom_call.1} parent=11 // pred_fallthru
          _
        // Predicated region
        $region25: #{tpu_custom_call.1} parent=11 // pred_check
          %p259 = pneg %p163
        $region26: #{tpu_custom_call.1} parent=11 // pred_check_branch
          %261 = sbr.rel (%p259) target = $region28
        $region27: #{tpu_custom_call.1} parent=11 // pred_region
          _
        $region28: #{tpu_custom_call.1} parent=11 // pred_fallthru
          _
      $region12: #{tpu_custom_call.1} parent=5 // pred_fallthru
        _
      %p262 = scmp.lt.s32.totalorder %s27, 2
      // Predicated region
      $region29: #{tpu_custom_call.1} parent=5 // pred_check
        %p263 = pneg %p262
      $region30: #{tpu_custom_call.1} parent=5 // pred_check_branch
        %265 = sbr.rel (%p263) target = $region32
      $region31: #{tpu_custom_call.1} parent=5 // pred_region
        // Predicated region
        $region33: #{tpu_custom_call.1} parent=31 // pred_check
          %p266 = pneg %p47
        $region34: #{tpu_custom_call.1} parent=31 // pred_check_branch
          %268 = sbr.rel (%p266) target = $region36
        $region35: #{tpu_custom_call.1} parent=31 // pred_region
          %s269 = sand.u32 %s37, 1
          %s270 = scalar_lea.sflag [#allocation3], %s269
          %s271 = sand.u32 %s37, 1
          %s272 = smul.addr %s271, 256
          %s273 = scalar_lea.vmem [#allocation2], %s272
          %s275 = ssub.s32 4096, 4096
          %276 = vsyncadd %s270, %s275
          %s277 = smul.addr %s27, 32
          %s278 = smul.addr %s277, 128
          %s279 = scalar_lea.hbm %s0, %s278
          %s280 = sshll.u32 %s273, 4
          %s281 = int_to_ptr.vmem [resolvable:$true] %s280
          %286 = dma.hbm_to_vmem [thread:$0]  %s279, 4096, %s281, %s270, 256, 256, 16
        $region36: #{tpu_custom_call.1} parent=31 // pred_fallthru
          _
        // Predicated region
        $region37: #{tpu_custom_call.1} parent=31 // pred_check
          %p287 = pneg %p73
        $region38: #{tpu_custom_call.1} parent=31 // pred_check_branch
          %289 = sbr.rel (%p287) target = $region40
        $region39: #{tpu_custom_call.1} parent=31 // pred_region
          %s290 = sand.u32 %s27, 1
          %s291 = scalar_lea.sflag [#allocation6], %s290
          %s292 = sand.u32 %s63, 1
          %s293 = smul.addr %s292, 2
          %s294 = scalar_lea.vmem [#allocation5], %s293
          %s296 = ssub.s32 32, 32
          %297 = vsyncadd %s291, %s296
          %s298 = smul.addr %s27, 32
          %s299 = scalar_lea.hbm %s1, %s298
          %s301 = sshll.u32 %s294, 4
          %s302 = int_to_ptr.vmem [resolvable:$true] %s301
          %304 = dma.hbm_to_vmem [thread:$0]  %s299, 32, %s302, %s291
        $region40: #{tpu_custom_call.1} parent=31 // pred_fallthru
          _
      $region32: #{tpu_custom_call.1} parent=5 // pred_fallthru
        _
      %p305 = scmp.le.s32.totalorder 1, %s27
      %p306 = scmp.lt.s32.totalorder %s27, 3
      %p307 = pnand %p305, %p306
      %p308 = pneg %p307
      // Predicated region
      $region41: #{tpu_custom_call.1} parent=5 // pred_check
        _
      $region42: #{tpu_custom_call.1} parent=5 // pred_check_branch
        %310 = sbr.rel (%p307) target = $region44
      $region43: #{tpu_custom_call.1} parent=5 // pred_region
        %s311 = ssub.s32 %s27, 1
        %s312 = sand.u32 %s40, 1
        %s313 = scalar_lea.sflag [#allocation3], %s312
        %s314 = sand.u32 %s40, 1
        %s315 = smul.addr %s314, 256
        %s316 = scalar_lea.vmem [#allocation2], %s315
        // Predicated region
        $region45: #{tpu_custom_call.1} parent=43 // pred_check
          %p317 = pneg %p53
        $region46: #{tpu_custom_call.1} parent=43 // pred_check_branch
          %319 = sbr.rel (%p317) target = $region48
        $region47: #{tpu_custom_call.1} parent=43 // pred_region
          %320 = dma.done %s313, 4096
        $region48: #{tpu_custom_call.1} parent=43 // pred_fallthru
          _
        %s321 = sand.u32 %s32, 1
        %s322 = scalar_lea.sflag [#allocation6], %s321
        %s323 = sand.u32 %s66, 1
        %s324 = smul.addr %s323, 2
        %s325 = scalar_lea.vmem [#allocation5], %s324
        // Predicated region
        $region49: #{tpu_custom_call.1} parent=43 // pred_check
          %p326 = pneg %p79
        $region50: #{tpu_custom_call.1} parent=43 // pred_check_branch
          %328 = sbr.rel (%p326) target = $region52
        $region51: #{tpu_custom_call.1} parent=43 // pred_region
          %329 = dma.done %s322, 32
        $region52: #{tpu_custom_call.1} parent=43 // pred_fallthru
          _
        // Predicated region
        $region53: #{tpu_custom_call.1} parent=43 // pred_check
          %p330 = pneg %p100
        $region54: #{tpu_custom_call.1} parent=43 // pred_check_branch
          %332 = sbr.rel (%p330) target = $region56
        $region55: #{tpu_custom_call.1} parent=43 // pred_region
          %333 = dma.done [#allocation6], 4096
        $region56: #{tpu_custom_call.1} parent=43 // pred_fallthru
          _
        // Predicated region
        $region57: #{tpu_custom_call.1} parent=43 // pred_check
          %p334 = pneg %p121
        $region58: #{tpu_custom_call.1} parent=43 // pred_check_branch
          %336 = sbr.rel (%p334) target = $region60
        $region59: #{tpu_custom_call.1} parent=43 // pred_region
          %337 = dma.done [#allocation9], 2048
        $region60: #{tpu_custom_call.1} parent=43 // pred_fallthru
          _
        %s338 = sand.u32 %s40, 1
        %s339 = scalar_lea.sflag [#allocation3], %s338
        %s340 = sand.u32 %s40, 1
        %s341 = smul.addr %s340, 256
        %s342 = scalar_lea.vmem [#allocation2], %s341
        %p343 = pneg %p53
        %p344 = pneg %p50
        %s345 = sand.u32 %s32, 1
        %s346 = scalar_lea.sflag [#allocation6], %s345
        %s347 = sand.u32 %s66, 1
        %s348 = smul.addr %s347, 2
        %s349 = scalar_lea.vmem [#allocation5], %s348
        %p350 = pneg %p79
        %p351 = pneg %p76
        %p352 = pneg %p100
        %p353 = pneg %p97
        %p354 = pneg %p121
        %p355 = pneg %p118
        %p356 = pneg %p142
        %p357 = pneg %p139
        %p358 = pneg %p163
        %p359 = pneg %p160
        %p360 = pneg %p189
        %p361 = pneg %p186
        %s362 = sand.u32 %s176, 1
        %s363 = scalar_lea.sflag [#allocation4], %s362
        %s364 = sand.u32 %s176, 1
        %s365 = smul.addr %s364, 4
        %s366 = scalar_lea.vmem [#allocation10], %s365
        %p367 = pneg %p215
        %p368 = pneg %p212
        %s369 = sand.u32 %s202, 1
        %s370 = scalar_lea.sflag [#allocation12], %s369
        %s371 = sand.u32 %s202, 1
        %s372 = smul.addr %s371, 2
        %s373 = scalar_lea.vmem [#allocation11], %s372
        %v374 = vld [vmem:[%s316] sm:$0xff]
        %v375 = vld [vmem:[%s316 + $0x8] sm:$0xff]
        %v376 = vld [vmem:[%s316 + $0x10] sm:$0xff]
        %v377 = vld [vmem:[%s316 + $0x18] sm:$0xff]
        %v378 = vld [vmem:[%s316 + $0x20] sm:$0xff]
        %v379 = vld [vmem:[%s316 + $0x28] sm:$0xff]
        %v380 = vld [vmem:[%s316 + $0x30] sm:$0xff]
        %v381 = vld [vmem:[%s316 + $0x38] sm:$0xff]
        %v382 = vld [vmem:[%s316 + $0x40] sm:$0xff]
        %v383 = vld [vmem:[%s316 + $0x48] sm:$0xff]
        %v384 = vld [vmem:[%s316 + $0x50] sm:$0xff]
        %v385 = vld [vmem:[%s316 + $0x58] sm:$0xff]
        %v386 = vld [vmem:[%s316 + $0x60] sm:$0xff]
        %v387 = vld [vmem:[%s316 + $0x68] sm:$0xff]
        %v388 = vld [vmem:[%s316 + $0x70] sm:$0xff]
        %v389 = vld [vmem:[%s316 + $0x78] sm:$0xff]
        %v390 = vld [vmem:[%s316 + $0x80] sm:$0xff]
        %v391 = vld [vmem:[%s316 + $0x88] sm:$0xff]
        %v392 = vld [vmem:[%s316 + $0x90] sm:$0xff]
        %v393 = vld [vmem:[%s316 + $0x98] sm:$0xff]
        %v394 = vld [vmem:[%s316 + $0xa0] sm:$0xff]
        %v395 = vld [vmem:[%s316 + $0xa8] sm:$0xff]
        %v396 = vld [vmem:[%s316 + $0xb0] sm:$0xff]
        %v397 = vld [vmem:[%s316 + $0xb8] sm:$0xff]
        %v398 = vld [vmem:[%s316 + $0xc0] sm:$0xff]
        %v399 = vld [vmem:[%s316 + $0xc8] sm:$0xff]
        %v400 = vld [vmem:[%s316 + $0xd0] sm:$0xff]
        %v401 = vld [vmem:[%s316 + $0xd8] sm:$0xff]
        %v402 = vld [vmem:[%s316 + $0xe0] sm:$0xff]
        %v403 = vld [vmem:[%s316 + $0xe8] sm:$0xff]
        %v404 = vld [vmem:[%s316 + $0xf0] sm:$0xff]
        %v405 = vld [vmem:[%s316 + $0xf8] sm:$0xff]
        %v406 = vld [vmem:[%s325] sm:$0x3]
        %v407 = vld [vmem:[#allocation7] sm:$0xff]
        %v408 = vld [vmem:[#allocation7 + $0x8] sm:$0xff]
        %v409 = vld [vmem:[#allocation7 + $0x10] sm:$0xff]
        %v410 = vld [vmem:[#allocation7 + $0x18] sm:$0xff]
        %v411 = vld [vmem:[#allocation7 + $0x20] sm:$0xff]
        %v412 = vld [vmem:[#allocation7 + $0x28] sm:$0xff]
        %v413 = vld [vmem:[#allocation7 + $0x30] sm:$0xff]
        %v414 = vld [vmem:[#allocation7 + $0x38] sm:$0xff]
        %v415 = vld [vmem:[#allocation7 + $0x40] sm:$0xff]
        %v416 = vld [vmem:[#allocation7 + $0x48] sm:$0xff]
        %v417 = vld [vmem:[#allocation7 + $0x50] sm:$0xff]
        %v418 = vld [vmem:[#allocation7 + $0x58] sm:$0xff]
        %v419 = vld [vmem:[#allocation7 + $0x60] sm:$0xff]
        %v420 = vld [vmem:[#allocation7 + $0x68] sm:$0xff]
        %v421 = vld [vmem:[#allocation7 + $0x70] sm:$0xff]
        %v422 = vld [vmem:[#allocation7 + $0x78] sm:$0xff]
        %v423 = vld [vmem:[#allocation7 + $0x80] sm:$0xff]
        %v424 = vld [vmem:[#allocation7 + $0x88] sm:$0xff]
        %v425 = vld [vmem:[#allocation7 + $0x90] sm:$0xff]
        %v426 = vld [vmem:[#allocation7 + $0x98] sm:$0xff]
        %v427 = vld [vmem:[#allocation7 + $0xa0] sm:$0xff]
        %v428 = vld [vmem:[#allocation7 + $0xa8] sm:$0xff]
        %v429 = vld [vmem:[#allocation7 + $0xb0] sm:$0xff]
        %v430 = vld [vmem:[#allocation7 + $0xb8] sm:$0xff]
        %v431 = vld [vmem:[#allocation7 + $0xc0] sm:$0xff]
        %v432 = vld [vmem:[#allocation7 + $0xc8] sm:$0xff]
        %v433 = vld [vmem:[#allocation7 + $0xd0] sm:$0xff]
        %v434 = vld [vmem:[#allocation7 + $0xd8] sm:$0xff]
        %v435 = vld [vmem:[#allocation7 + $0xe0] sm:$0xff]
        %v436 = vld [vmem:[#allocation7 + $0xe8] sm:$0xff]
        %v437 = vld [vmem:[#allocation7 + $0xf0] sm:$0xff]
        %v438 = vld [vmem:[#allocation7 + $0xf8] sm:$0xff]
        %439 = vmatprep.subr.mxu0 0.0
        %440 = vmatpush1.msra.mxu0 %v407
        %441 = vmatprep.subr.mxu0 0.0
        %442 = vmatpush1.msra.mxu0 %v408
        %443 = vmatprep.subr.mxu0 0.0
        %444 = vmatpush1.msra.mxu0 %v409
        %445 = vmatprep.subr.mxu0 0.0
        %446 = vmatpush1.msra.mxu0 %v410
        %447 = vmatprep.subr.mxu0 0.0
        %448 = vmatpush1.msra.mxu0 %v411
        %449 = vmatprep.subr.mxu0 0.0
        %450 = vmatpush1.msra.mxu0 %v412
        %451 = vmatprep.subr.mxu0 0.0
        %452 = vmatpush1.msra.mxu0 %v413
        %453 = vmatprep.subr.mxu0 0.0
        %454 = vmatpush1.msra.mxu0 %v414
        %455 = vmatprep.subr.mxu0 0.0
        %456 = vmatpush1.msra.mxu0 %v415
        %457 = vmatprep.subr.mxu0 0.0
        %458 = vmatpush1.msra.mxu0 %v416
        %459 = vmatprep.subr.mxu0 0.0
        %460 = vmatpush1.msra.mxu0 %v417
        %461 = vmatprep.subr.mxu0 0.0
        %462 = vmatpush1.msra.mxu0 %v418
        %463 = vmatprep.subr.mxu0 0.0
        %464 = vmatpush1.msra.mxu0 %v419
        %465 = vmatprep.subr.mxu0 0.0
        %466 = vmatpush1.msra.mxu0 %v420
        %467 = vmatprep.subr.mxu0 0.0
        %468 = vmatpush1.msra.mxu0 %v421
        %469 = vmatprep.subr.mxu0 0.0
        %470 = vmatpush1.msra.mxu0 %v422
        %471 = vmatprep.subr.mxu0 0.0
        %472 = vmatpush1.msra.mxu0 %v423
        %473 = vmatprep.subr.mxu0 0.0
        %474 = vmatpush1.msra.mxu0 %v424
        %475 = vmatprep.subr.mxu0 0.0
        %476 = vmatpush1.msra.mxu0 %v425
        %477 = vmatprep.subr.mxu0 0.0
        %478 = vmatpush1.msra.mxu0 %v426
        %479 = vmatprep.subr.mxu0 0.0
        %480 = vmatpush1.msra.mxu0 %v427
        %481 = vmatprep.subr.mxu0 0.0
        %482 = vmatpush1.msra.mxu0 %v428
        %483 = vmatprep.subr.mxu0 0.0
        %484 = vmatpush1.msra.mxu0 %v429
        %485 = vmatprep.subr.mxu0 0.0
        %486 = vmatpush1.msra.mxu0 %v430
        %487 = vmatprep.subr.mxu0 0.0
        %488 = vmatpush1.msra.mxu0 %v431
        %489 = vmatprep.subr.mxu0 0.0
        %490 = vmatpush1.msra.mxu0 %v432
        %491 = vmatprep.subr.mxu0 0.0
        %492 = vmatpush1.msra.mxu0 %v433
        %493 = vmatprep.subr.mxu0 0.0
        %494 = vmatpush1.msra.mxu0 %v434
        %495 = vmatprep.subr.mxu0 0.0
        %496 = vmatpush1.msra.mxu0 %v435
        %497 = vmatprep.subr.mxu0 0.0
        %498 = vmatpush1.msra.mxu0 %v436
        %499 = vmatprep.subr.mxu0 0.0
        %500 = vmatpush1.msra.mxu0 %v437
        %501 = vmatprep.subr.mxu0 0.0
        %502 = vmatpush1.msra.mxu0 %v438
        %503 = vmatprep.mubr.f32.mxu0 %v375
        %504 = vmatmul.mubr.f32.gmra.mrb[0].mxu0 %v374
        %v505 = vpop.f32.mrb[0].mxu0
        %v506 = vadd.f32 0.0, %v505
        %v507 = vpop.f32.mrb[0].mxu0
        %508 = vmatprep.mubr.f32.mxu0 %v377
        %509 = vmatmul.mubr.f32.gmra.mrb[0].mxu0 %v376
        %v510 = vpop.f32.mrb[0].mxu0
        %v511 = vadd.f32 0.0, %v510
        %v512 = vpop.f32.mrb[0].mxu0
        %513 = vmatprep.mubr.f32.mxu0 %v379
        %514 = vmatmul.mubr.f32.gmra.mrb[0].mxu0 %v378
        %v515 = vpop.f32.mrb[0].mxu0
        %v516 = vadd.f32 0.0, %v515
        %v517 = vpop.f32.mrb[0].mxu0
        %518 = vmatprep.mubr.f32.mxu0 %v381
        %519 = vmatmul.mubr.f32.gmra.mrb[0].mxu0 %v380
        %v520 = vpop.f32.mrb[0].mxu0
        %v521 = vadd.f32 0.0, %v520
        %v522 = vpop.f32.mrb[0].mxu0
        %523 = vmatprep.mubr.f32.mxu0 %v383
        %524 = vmatmul.mubr.f32.gmra.mrb[0].mxu0 %v382
        %v525 = vpop.f32.mrb[0].mxu0
        %v526 = vadd.f32 0.0, %v525
        %v527 = vpop.f32.mrb[0].mxu0
        %528 = vmatprep.mubr.f32.mxu0 %v385
        %529 = vmatmul.mubr.f32.gmra.mrb[0].mxu0 %v384
        %v530 = vpop.f32.mrb[0].mxu0
        %v531 = vadd.f32 0.0, %v530
        %v532 = vpop.f32.mrb[0].mxu0
        %533 = vmatprep.mubr.f32.mxu0 %v387
        %534 = vmatmul.mubr.f32.gmra.mrb[0].mxu0 %v386
        %v535 = vpop.f32.mrb[0].mxu0
        %v536 = vadd.f32 0.0, %v535
        %v537 = vpop.f32.mrb[0].mxu0
        %538 = vmatprep.mubr.f32.mxu0 %v389
        %539 = vmatmul.mubr.f32.gmra.mrb[0].mxu0 %v388
        %v540 = vpop.f32.mrb[0].mxu0
        %v541 = vadd.f32 0.0, %v540
        %v542 = vpop.f32.mrb[0].mxu0
        %543 = vmatprep.mubr.f32.mxu0 %v391
        %544 = vmatmul.mubr.f32.gmra.mrb[0].mxu0 %v390
        %v545 = vpop.f32.mrb[0].mxu0
        %v546 = vadd.f32 0.0, %v545
        %v547 = vpop.f32.mrb[0].mxu0
        %548 = vmatprep.mubr.f32.mxu0 %v393
        %549 = vmatmul.mubr.f32.gmra.mrb[0].mxu0 %v392
        %v550 = vpop.f32.mrb[0].mxu0
        %v551 = vadd.f32 0.0, %v550
        %v552 = vpop.f32.mrb[0].mxu0
        %553 = vmatprep.mubr.f32.mxu0 %v395
        %554 = vmatmul.mubr.f32.gmra.mrb[0].mxu0 %v394
        %v555 = vpop.f32.mrb[0].mxu0
        %v556 = vadd.f32 0.0, %v555
        %v557 = vpop.f32.mrb[0].mxu0
        %558 = vmatprep.mubr.f32.mxu0 %v397
        %559 = vmatmul.mubr.f32.gmra.mrb[0].mxu0 %v396
        %v560 = vpop.f32.mrb[0].mxu0
        %v561 = vadd.f32 0.0, %v560
        %v562 = vpop.f32.mrb[0].mxu0
        %563 = vmatprep.mubr.f32.mxu0 %v399
        %564 = vmatmul.mubr.f32.gmra.mrb[0].mxu0 %v398
        %v565 = vpop.f32.mrb[0].mxu0
        %v566 = vadd.f32 0.0, %v565
        %v567 = vpop.f32.mrb[0].mxu0
        %568 = vmatprep.mubr.f32.mxu0 %v401
        %569 = vmatmul.mubr.f32.gmra.mrb[0].mxu0 %v400
        %v570 = vpop.f32.mrb[0].mxu0
        %v571 = vadd.f32 0.0, %v570
        %v572 = vpop.f32.mrb[0].mxu0
        %573 = vmatprep.mubr.f32.mxu0 %v403
        %574 = vmatmul.mubr.f32.gmra.mrb[0].mxu0 %v402
        %v575 = vpop.f32.mrb[0].mxu0
        %v576 = vadd.f32 0.0, %v575
        %v577 = vpop.f32.mrb[0].mxu0
        %578 = vmatprep.mubr.f32.mxu0 %v405
        %579 = vmatmul.mubr.f32.gmra.mrb[0].mxu0 %v404
        %v580 = vpop.f32.mrb[0].mxu0
        %v581 = vadd.f32 0.0, %v580
        %v582 = vpop.f32.mrb[0].mxu0
        %583 = vdwg.mxu0
        %v584 = vld [vmem:[#allocation8] sm:$0xff]
        %v585 = vld [vmem:[#allocation8 + $0x8] sm:$0xff]
        %v586 = vld [vmem:[#allocation8 + $0x10] sm:$0xff]
        %v587 = vld [vmem:[#allocation8 + $0x18] sm:$0xff]
        %v588 = vld [vmem:[#allocation8 + $0x20] sm:$0xff]
        %v589 = vld [vmem:[#allocation8 + $0x28] sm:$0xff]
        %v590 = vld [vmem:[#allocation8 + $0x30] sm:$0xff]
        %v591 = vld [vmem:[#allocation8 + $0x38] sm:$0xff]
        %v592 = vld [vmem:[#allocation8 + $0x40] sm:$0xff]
        %v593 = vld [vmem:[#allocation8 + $0x48] sm:$0xff]
        %v594 = vld [vmem:[#allocation8 + $0x50] sm:$0xff]
        %v595 = vld [vmem:[#allocation8 + $0x58] sm:$0xff]
        %v596 = vld [vmem:[#allocation8 + $0x60] sm:$0xff]
        %v597 = vld [vmem:[#allocation8 + $0x68] sm:$0xff]
        %v598 = vld [vmem:[#allocation8 + $0x70] sm:$0xff]
        %v599 = vld [vmem:[#allocation8 + $0x78] sm:$0xff]
        %v600 = vld [vmem:[%s4] sm:$0x1]
        %v602 = vlaneseq
        %v603 = vshrl.u32 %v602, 7
        %v604 = vsub.s32 0, %v603
        %v605 = vrot.slane %v600, %v604
        %607 = vmatprep.subr.mxu0 0.0
        %608 = vmatpush1.msra.mxu0 %v584
        %609 = vmatprep.subr.mxu0 0.0
        %610 = vmatpush1.msra.mxu0 %v585
        %611 = vmatprep.subr.mxu0 0.0
        %612 = vmatpush1.msra.mxu0 %v586
        %613 = vmatprep.subr.mxu0 0.0
        %614 = vmatpush1.msra.mxu0 %v587
        %615 = vmatprep.subr.mxu0 0.0
        %616 = vmatpush1.msra.mxu0 %v588
        %617 = vmatprep.subr.mxu0 0.0
        %618 = vmatpush1.msra.mxu0 %v589
        %619 = vmatprep.subr.mxu0 0.0
        %620 = vmatpush1.msra.mxu0 %v590
        %621 = vmatprep.subr.mxu0 0.0
        %622 = vmatpush1.msra.mxu0 %v591
        %623 = vmatprep.subr.mxu0 0.0
        %624 = vmatpush1.msra.mxu0 %v592
        %625 = vmatprep.subr.mxu0 0.0
        %626 = vmatpush1.msra.mxu0 %v593
        %627 = vmatprep.subr.mxu0 0.0
        %628 = vmatpush1.msra.mxu0 %v594
        %629 = vmatprep.subr.mxu0 0.0
        %630 = vmatpush1.msra.mxu0 %v595
        %631 = vmatprep.subr.mxu0 0.0
        %632 = vmatpush1.msra.mxu0 %v596
        %633 = vmatprep.subr.mxu0 0.0
        %634 = vmatpush1.msra.mxu0 %v597
        %635 = vmatprep.subr.mxu0 0.0
        %636 = vmatpush1.msra.mxu0 %v598
        %637 = vmatprep.subr.mxu0 0.0
        %638 = vmatpush1.msra.mxu0 %v599
        %639 = vmatprep.subr.mxu0 0.0
        %640 = vmatpush1.msra.mxu0 0.0
        %641 = vmatprep.subr.mxu0 0.0
        %642 = vmatpush1.msra.mxu0 0.0
        %643 = vmatprep.subr.mxu0 0.0
        %644 = vmatpush1.msra.mxu0 0.0
        %645 = vmatprep.subr.mxu0 0.0
        %646 = vmatpush1.msra.mxu0 0.0
        %647 = vmatprep.subr.mxu0 0.0
        %648 = vmatpush1.msra.mxu0 0.0
        %649 = vmatprep.subr.mxu0 0.0
        %650 = vmatpush1.msra.mxu0 0.0
        %651 = vmatprep.subr.mxu0 0.0
        %652 = vmatpush1.msra.mxu0 0.0
        %653 = vmatprep.subr.mxu0 0.0
        %654 = vmatpush1.msra.mxu0 0.0
        %655 = vmatprep.subr.mxu0 0.0
        %656 = vmatpush1.msra.mxu0 0.0
        %657 = vmatprep.subr.mxu0 0.0
        %658 = vmatpush1.msra.mxu0 0.0
        %659 = vmatprep.subr.mxu0 0.0
        %660 = vmatpush1.msra.mxu0 0.0
        %661 = vmatprep.subr.mxu0 0.0
        %662 = vmatpush1.msra.mxu0 0.0
        %663 = vmatprep.subr.mxu0 0.0
        %664 = vmatpush1.msra.mxu0 0.0
        %665 = vmatprep.subr.mxu0 0.0
        %666 = vmatpush1.msra.mxu0 0.0
        %667 = vmatprep.subr.mxu0 0.0
        %668 = vmatpush1.msra.mxu0 0.0
        %669 = vmatprep.subr.mxu0 0.0
        %670 = vmatpush1.msra.mxu0 0.0
        %671 = vmatprep.mubr.f32.mxu0 0.0
        %672 = vmatmul.mubr.f32.gmra.mrb[0].mxu0 %v406
        %v673 = vpop.f32.mrb[0].mxu0
        %v674 = vadd.f32 %v605, %v673
        %v675 = vpop.f32.mrb[0].mxu0
        %676 = vdwg.mxu0
        %v679 = vunpack.c.l.s4 1966171168
        %v680 = vunpack.c.0.s8 %v679
        %v681 = vlaneseq
        %v682 = vshrl.u32 %v681, 7
        %v683 = vsub.s32 %v680, %v682
        %v684 = vrot.slane %v674, %v683
        %v685 = vcombine.high %v684, %v684
        %v687 = vunpack.c.l.s4 1966171168
        %v688 = vunpack.c.0.s8 %v687
        %v689 = vlaneseq
        %v690 = vshrl.u32 %v689, 7
        %v691 = vsub.s32 %v688, %v690
        %v692 = vrot.slane %v684, %v691
        %v694 = vunpack.c.l.s4 1966171168
        %v695 = vunpack.c.0.s8 %v694
        %v696 = vlaneseq
        %v697 = vshrl.u32 %v696, 7
        %v698 = vsub.s32 %v695, %v697
        %v699 = vrot.slane %v685, %v698
        %v700 = vlaneseq
        %v701 = vshrl.u32 %v700, 7
        %v702 = vsub.s32 0, %v701
        %v703 = vrot.slane %v692, %v702
        %v704 = vlaneseq
        %v705 = vshrl.u32 %v704, 7
        %v706 = vsub.s32 0, %v705
        %v707 = vrot.slane %v699, %v706
        %v710 = vadd.f32 %v506, %v703
        %v711 = vadd.f32 %v511, %v703
        %v712 = vadd.f32 %v516, %v703
        %v713 = vadd.f32 %v521, %v703
        %v714 = vadd.f32 %v526, %v703
        %v715 = vadd.f32 %v531, %v703
        %v716 = vadd.f32 %v536, %v703
        %v717 = vadd.f32 %v541, %v703
        %v718 = vadd.f32 %v546, %v707
        %v719 = vadd.f32 %v551, %v707
        %v720 = vadd.f32 %v556, %v707
        %v721 = vadd.f32 %v561, %v707
        %v722 = vadd.f32 %v566, %v707
        %v723 = vadd.f32 %v571, %v707
        %v724 = vadd.f32 %v576, %v707
        %v725 = vadd.f32 %v581, %v707
        %v726 = vtanh.pop %v710
        %v727 = vtanh.pop %v711
        %v728 = vtanh.pop %v712
        %v729 = vtanh.pop %v713
        %v730 = vtanh.pop %v714
        %v731 = vtanh.pop %v715
        %v732 = vtanh.pop %v716
        %v733 = vtanh.pop %v717
        %v734 = vtanh.pop %v718
        %v735 = vtanh.pop %v719
        %v736 = vtanh.pop %v720
        %v737 = vtanh.pop %v721
        %v738 = vtanh.pop %v722
        %v739 = vtanh.pop %v723
        %v740 = vtanh.pop %v724
        %v741 = vtanh.pop %v725
        %v742 = vld [vmem:[%s5] sm:$0x1]
        %v744 = vlaneseq
        %v745 = vshrl.u32 %v744, 7
        %v746 = vsub.s32 0, %v745
        %v747 = vrot.slane %v742, %v746
        %v749 = vmul.f32 %v726, %v747
        %v750 = vmul.f32 %v727, %v747
        %v751 = vmul.f32 %v728, %v747
        %v752 = vmul.f32 %v729, %v747
        %v753 = vmul.f32 %v730, %v747
        %v754 = vmul.f32 %v731, %v747
        %v755 = vmul.f32 %v732, %v747
        %v756 = vmul.f32 %v733, %v747
        %v757 = vmul.f32 %v734, %v747
        %v758 = vmul.f32 %v735, %v747
        %v759 = vmul.f32 %v736, %v747
        %v760 = vmul.f32 %v737, %v747
        %v761 = vmul.f32 %v738, %v747
        %v762 = vmul.f32 %v739, %v747
        %v763 = vmul.f32 %v740, %v747
        %v764 = vmul.f32 %v741, %v747
        %765 = vadd.xlane.f32.xlu0 %v749
        %v766 = vpop.xlane.xlu0 %765
        %767 = vadd.xlane.f32.xlu0 %v750
        %v768 = vpop.xlane.xlu0 %767
        %769 = vadd.xlane.f32.xlu0 %v751
        %v770 = vpop.xlane.xlu0 %769
        %771 = vadd.xlane.f32.xlu0 %v752
        %v772 = vpop.xlane.xlu0 %771
        %773 = vadd.xlane.f32.xlu0 %v753
        %v774 = vpop.xlane.xlu0 %773
        %775 = vadd.xlane.f32.xlu0 %v754
        %v776 = vpop.xlane.xlu0 %775
        %777 = vadd.xlane.f32.xlu0 %v755
        %v778 = vpop.xlane.xlu0 %777
        %779 = vadd.xlane.f32.xlu0 %v756
        %v780 = vpop.xlane.xlu0 %779
        %781 = vadd.xlane.f32.xlu0 %v757
        %v782 = vpop.xlane.xlu0 %781
        %783 = vadd.xlane.f32.xlu0 %v758
        %v784 = vpop.xlane.xlu0 %783
        %785 = vadd.xlane.f32.xlu0 %v759
        %v786 = vpop.xlane.xlu0 %785
        %787 = vadd.xlane.f32.xlu0 %v760
        %v788 = vpop.xlane.xlu0 %787
        %789 = vadd.xlane.f32.xlu0 %v761
        %v790 = vpop.xlane.xlu0 %789
        %791 = vadd.xlane.f32.xlu0 %v762
        %v792 = vpop.xlane.xlu0 %791
        %793 = vadd.xlane.f32.xlu0 %v763
        %v794 = vpop.xlane.xlu0 %793
        %795 = vadd.xlane.f32.xlu0 %v764
        %v796 = vpop.xlane.xlu0 %795
        %v813 = vlaneseq
        %v814 = vand.u32 %v813, 127
        %v815 = vlaneseq
        %v816 = vshrl.u32 %v815, 7
        %v817 = vsub.s32 %v814, %v816
        %v818 = vrot.slane %v766, %v817
        %v819 = vadd.s32 %v814, 4294967288
        %v820 = vlaneseq
        %v821 = vshrl.u32 %v820, 7
        %v822 = vsub.s32 %v819, %v821
        %v823 = vrot.slane %v768, %v822
        %vm824 = vcmask 130112
        %v825 = vsel %vm824, %v823, %v818
        %v826 = vadd.s32 %v814, 4294967280
        %v827 = vlaneseq
        %v828 = vshrl.u32 %v827, 7
        %v829 = vsub.s32 %v826, %v828
        %v830 = vrot.slane %v770, %v829
        %vm831 = vcmask 195712
        %v832 = vsel %vm831, %v830, %v825
        %v833 = vadd.s32 %v814, 4294967272
        %v834 = vlaneseq
        %v835 = vshrl.u32 %v834, 7
        %v836 = vsub.s32 %v833, %v835
        %v837 = vrot.slane %v772, %v836
        %vm838 = vcmask 261312
        %v839 = vsel %vm838, %v837, %v832
        %v840 = vadd.s32 %v814, 4294967264
        %v841 = vlaneseq
        %v842 = vshrl.u32 %v841, 7
        %v843 = vsub.s32 %v840, %v842
        %v844 = vrot.slane %v774, %v843
        %vm845 = vcmask 326912
        %v846 = vsel %vm845, %v844, %v839
        %v847 = vadd.s32 %v814, 4294967256
        %v848 = vlaneseq
        %v849 = vshrl.u32 %v848, 7
        %v850 = vsub.s32 %v847, %v849
        %v851 = vrot.slane %v776, %v850
        %vm852 = vcmask 392512
        %v853 = vsel %vm852, %v851, %v846
        %v854 = vadd.s32 %v814, 4294967248
        %v855 = vlaneseq
        %v856 = vshrl.u32 %v855, 7
        %v857 = vsub.s32 %v854, %v856
        %v858 = vrot.slane %v778, %v857
        %vm859 = vcmask 458112
        %v860 = vsel %vm859, %v858, %v853
        %v861 = vadd.s32 %v814, 4294967240
        %v862 = vlaneseq
        %v863 = vshrl.u32 %v862, 7
        %v864 = vsub.s32 %v861, %v863
        %v865 = vrot.slane %v780, %v864
        %vm866 = vcmask 523712
        %v867 = vsel %vm866, %v865, %v860
        %v868 = vlaneseq
        %v869 = vshrl.u32 %v868, 7
        %v870 = vsub.s32 %v814, %v869
        %v871 = vrot.slane %v782, %v870
        %v872 = vlaneseq
        %v873 = vshrl.u32 %v872, 7
        %v874 = vsub.s32 %v819, %v873
        %v875 = vrot.slane %v784, %v874
        %v876 = vsel %vm824, %v875, %v871
        %v877 = vlaneseq
        %v878 = vshrl.u32 %v877, 7
        %v879 = vsub.s32 %v826, %v878
        %v880 = vrot.slane %v786, %v879
        %v881 = vsel %vm831, %v880, %v876
        %v882 = vlaneseq
        %v883 = vshrl.u32 %v882, 7
        %v884 = vsub.s32 %v833, %v883
        %v885 = vrot.slane %v788, %v884
        %v886 = vsel %vm838, %v885, %v881
        %v887 = vlaneseq
        %v888 = vshrl.u32 %v887, 7
        %v889 = vsub.s32 %v840, %v888
        %v890 = vrot.slane %v790, %v889
        %v891 = vsel %vm845, %v890, %v886
        %v892 = vlaneseq
        %v893 = vshrl.u32 %v892, 7
        %v894 = vsub.s32 %v847, %v893
        %v895 = vrot.slane %v792, %v894
        %v896 = vsel %vm852, %v895, %v891
        %v897 = vlaneseq
        %v898 = vshrl.u32 %v897, 7
        %v899 = vsub.s32 %v854, %v898
        %v900 = vrot.slane %v794, %v899
        %v901 = vsel %vm859, %v900, %v896
        %v902 = vlaneseq
        %v903 = vshrl.u32 %v902, 7
        %v904 = vsub.s32 %v861, %v903
        %v905 = vrot.slane %v796, %v904
        %v906 = vsel %vm866, %v905, %v901
        %vm907 = vcmask 1041409
        %v908 = vsel %vm907, %v906, %v867
        %vm910 = vcmask 517120
        %v911 = vsel %vm910, %v908, -inf
        %912 = vmax.xlane.f32.xlu0 %v911
        %v913 = vpop.xlane.xlu0 %912
        %v915 = vlaneseq
        %v916 = vshrl.u32 %v915, 7
        %v917 = vsub.s32 0, %v916
        %v918 = vrot.slane %v913, %v917
        %v919 = vlaneseq
        %v920 = vshrl.u32 %v919, 7
        %v921 = vsub.s32 1, %v920
        %v922 = vrot.slane %v913, %v921
        %v925 = vsub.f32 %v766, %v918
        %v926 = vsub.f32 %v768, %v918
        %v927 = vsub.f32 %v770, %v918
        %v928 = vsub.f32 %v772, %v918
        %v929 = vsub.f32 %v774, %v918
        %v930 = vsub.f32 %v776, %v918
        %v931 = vsub.f32 %v778, %v918
        %v932 = vsub.f32 %v780, %v918
        %v933 = vsub.f32 %v782, %v922
        %v934 = vsub.f32 %v784, %v922
        %v935 = vsub.f32 %v786, %v922
        %v936 = vsub.f32 %v788, %v922
        %v937 = vsub.f32 %v790, %v922
        %v938 = vsub.f32 %v792, %v922
        %v939 = vsub.f32 %v794, %v922
        %v940 = vsub.f32 %v796, %v922
        %v941 = vmul.f32 %v925, 1.442695
        %v942 = vpow.pop %v941
        %v943 = vmul.f32 %v926, 1.442695
        %v944 = vpow.pop %v943
        %v945 = vmul.f32 %v927, 1.442695
        %v946 = vpow.pop %v945
        %v947 = vmul.f32 %v928, 1.442695
        %v948 = vpow.pop %v947
        %v949 = vmul.f32 %v929, 1.442695
        %v950 = vpow.pop %v949
        %v951 = vmul.f32 %v930, 1.442695
        %v952 = vpow.pop %v951
        %v953 = vmul.f32 %v931, 1.442695
        %v954 = vpow.pop %v953
        %v955 = vmul.f32 %v932, 1.442695
        %v956 = vpow.pop %v955
        %v957 = vmul.f32 %v933, 1.442695
        %v958 = vpow.pop %v957
        %v959 = vmul.f32 %v934, 1.442695
        %v960 = vpow.pop %v959
        %v961 = vmul.f32 %v935, 1.442695
        %v962 = vpow.pop %v961
        %v963 = vmul.f32 %v936, 1.442695
        %v964 = vpow.pop %v963
        %v965 = vmul.f32 %v937, 1.442695
        %v966 = vpow.pop %v965
        %v967 = vmul.f32 %v938, 1.442695
        %v968 = vpow.pop %v967
        %v969 = vmul.f32 %v939, 1.442695
        %v970 = vpow.pop %v969
        %v971 = vmul.f32 %v940, 1.442695
        %v972 = vpow.pop %v971
        %989 = vset.pattern.permute.xlu0 0
        %990 = vperm.xlu0 %989, %v942
        %v991 = vpop.permute.xlu0 %990
        %992 = vset.pattern.permute.xlu0 0
        %993 = vperm.xlu0 %992, %v944
        %v994 = vpop.permute.xlu0 %993
        %995 = vset.pattern.permute.xlu0 0
        %996 = vperm.xlu0 %995, %v946
        %v997 = vpop.permute.xlu0 %996
        %998 = vset.pattern.permute.xlu0 0
        %999 = vperm.xlu0 %998, %v948
        %v1000 = vpop.permute.xlu0 %999
        %1001 = vset.pattern.permute.xlu0 0
        %1002 = vperm.xlu0 %1001, %v950
        %v1003 = vpop.permute.xlu0 %1002
        %1004 = vset.pattern.permute.xlu0 0
        %1005 = vperm.xlu0 %1004, %v952
        %v1006 = vpop.permute.xlu0 %1005
        %1007 = vset.pattern.permute.xlu0 0
        %1008 = vperm.xlu0 %1007, %v954
        %v1009 = vpop.permute.xlu0 %1008
        %1010 = vset.pattern.permute.xlu0 0
        %1011 = vperm.xlu0 %1010, %v956
        %v1012 = vpop.permute.xlu0 %1011
        %1013 = vset.pattern.permute.xlu0 0
        %1014 = vperm.xlu0 %1013, %v958
        %v1015 = vpop.permute.xlu0 %1014
        %1016 = vset.pattern.permute.xlu0 0
        %1017 = vperm.xlu0 %1016, %v960
        %v1018 = vpop.permute.xlu0 %1017
        %1019 = vset.pattern.permute.xlu0 0
        %1020 = vperm.xlu0 %1019, %v962
        %v1021 = vpop.permute.xlu0 %1020
        %1022 = vset.pattern.permute.xlu0 0
        %1023 = vperm.xlu0 %1022, %v964
        %v1024 = vpop.permute.xlu0 %1023
        %1025 = vset.pattern.permute.xlu0 0
        %1026 = vperm.xlu0 %1025, %v966
        %v1027 = vpop.permute.xlu0 %1026
        %1028 = vset.pattern.permute.xlu0 0
        %1029 = vperm.xlu0 %1028, %v968
        %v1030 = vpop.permute.xlu0 %1029
        %1031 = vset.pattern.permute.xlu0 0
        %1032 = vperm.xlu0 %1031, %v970
        %v1033 = vpop.permute.xlu0 %1032
        %1034 = vset.pattern.permute.xlu0 0
        %1035 = vperm.xlu0 %1034, %v972
        %v1036 = vpop.permute.xlu0 %1035
        %v1037 = vlaneseq
        %v1038 = vshrl.u32 %v1037, 7
        %v1039 = vsub.s32 %v814, %v1038
        %v1040 = vrot.slane %v991, %v1039
        %v1041 = vlaneseq
        %v1042 = vshrl.u32 %v1041, 7
        %v1043 = vsub.s32 %v819, %v1042
        %v1044 = vrot.slane %v994, %v1043
        %v1045 = vsel %vm824, %v1044, %v1040
        %v1046 = vlaneseq
        %v1047 = vshrl.u32 %v1046, 7
        %v1048 = vsub.s32 %v826, %v1047
        %v1049 = vrot.slane %v997, %v1048
        %v1050 = vsel %vm831, %v1049, %v1045
        %v1051 = vlaneseq
        %v1052 = vshrl.u32 %v1051, 7
        %v1053 = vsub.s32 %v833, %v1052
        %v1054 = vrot.slane %v1000, %v1053
        %v1055 = vsel %vm838, %v1054, %v1050
        %v1056 = vlaneseq
        %v1057 = vshrl.u32 %v1056, 7
        %v1058 = vsub.s32 %v840, %v1057
        %v1059 = vrot.slane %v1003, %v1058
        %v1060 = vsel %vm845, %v1059, %v1055
        %v1061 = vlaneseq
        %v1062 = vshrl.u32 %v1061, 7
        %v1063 = vsub.s32 %v847, %v1062
        %v1064 = vrot.slane %v1006, %v1063
        %v1065 = vsel %vm852, %v1064, %v1060
        %v1066 = vlaneseq
        %v1067 = vshrl.u32 %v1066, 7
        %v1068 = vsub.s32 %v854, %v1067
        %v1069 = vrot.slane %v1009, %v1068
        %v1070 = vsel %vm859, %v1069, %v1065
        %v1071 = vlaneseq
        %v1072 = vshrl.u32 %v1071, 7
        %v1073 = vsub.s32 %v861, %v1072
        %v1074 = vrot.slane %v1012, %v1073
        %v1075 = vsel %vm866, %v1074, %v1070
        %v1076 = vlaneseq
        %v1077 = vshrl.u32 %v1076, 7
        %v1078 = vsub.s32 %v814, %v1077
        %v1079 = vrot.slane %v1015, %v1078
        %v1080 = vlaneseq
        %v1081 = vshrl.u32 %v1080, 7
        %v1082 = vsub.s32 %v819, %v1081
        %v1083 = vrot.slane %v1018, %v1082
        %v1084 = vsel %vm824, %v1083, %v1079
        %v1085 = vlaneseq
        %v1086 = vshrl.u32 %v1085, 7
        %v1087 = vsub.s32 %v826, %v1086
        %v1088 = vrot.slane %v1021, %v1087
        %v1089 = vsel %vm831, %v1088, %v1084
        %v1090 = vlaneseq
        %v1091 = vshrl.u32 %v1090, 7
        %v1092 = vsub.s32 %v833, %v1091
        %v1093 = vrot.slane %v1024, %v1092
        %v1094 = vsel %vm838, %v1093, %v1089
        %v1095 = vlaneseq
        %v1096 = vshrl.u32 %v1095, 7
        %v1097 = vsub.s32 %v840, %v1096
        %v1098 = vrot.slane %v1027, %v1097
        %v1099 = vsel %vm845, %v1098, %v1094
        %v1100 = vlaneseq
        %v1101 = vshrl.u32 %v1100, 7
        %v1102 = vsub.s32 %v847, %v1101
        %v1103 = vrot.slane %v1030, %v1102
        %v1104 = vsel %vm852, %v1103, %v1099
        %v1105 = vlaneseq
        %v1106 = vshrl.u32 %v1105, 7
        %v1107 = vsub.s32 %v854, %v1106
        %v1108 = vrot.slane %v1033, %v1107
        %v1109 = vsel %vm859, %v1108, %v1104
        %v1110 = vlaneseq
        %v1111 = vshrl.u32 %v1110, 7
        %v1112 = vsub.s32 %v861, %v1111
        %v1113 = vrot.slane %v1036, %v1112
        %v1114 = vsel %vm866, %v1113, %v1109
        %v1115 = vsel %vm907, %v1114, %v1075
        %v1117 = vsel %vm910, %v1115, 0.0
        %1118 = vadd.xlane.f32.xlu0 %v1117
        %v1119 = vpop.xlane.xlu0 %1118
        %v1120 = vrcp.pop %v1119
        %v1122 = vlaneseq
        %v1123 = vshrl.u32 %v1122, 7
        %v1124 = vsub.s32 0, %v1123
        %v1125 = vrot.slane %v1120, %v1124
        %v1126 = vlaneseq
        %v1127 = vshrl.u32 %v1126, 7
        %v1128 = vsub.s32 1, %v1127
        %v1129 = vrot.slane %v1120, %v1128
        %v1132 = vmul.f32 %v942, %v1125
        %v1133 = vmul.f32 %v944, %v1125
        %v1134 = vmul.f32 %v946, %v1125
        %v1135 = vmul.f32 %v948, %v1125
        %v1136 = vmul.f32 %v950, %v1125
        %v1137 = vmul.f32 %v952, %v1125
        %v1138 = vmul.f32 %v954, %v1125
        %v1139 = vmul.f32 %v956, %v1125
        %v1140 = vmul.f32 %v958, %v1129
        %v1141 = vmul.f32 %v960, %v1129
        %v1142 = vmul.f32 %v962, %v1129
        %v1143 = vmul.f32 %v964, %v1129
        %v1144 = vmul.f32 %v966, %v1129
        %v1145 = vmul.f32 %v968, %v1129
        %v1146 = vmul.f32 %v970, %v1129
        %v1147 = vmul.f32 %v972, %v1129
        %1149 = vset.pattern.permute.xlu0 0
        %1150 = vperm.xlu0 %1149, %v1132
        %v1151 = vpop.permute.xlu0 %1150
        %1154 = vset.pattern.permute.xlu0 0
        %1155 = vperm.xlu0 %1154, %v1133
        %v1156 = vpop.permute.xlu0 %1155
        %1159 = vset.pattern.permute.xlu0 0
        %1160 = vperm.xlu0 %1159, %v1134
        %v1161 = vpop.permute.xlu0 %1160
        %1164 = vset.pattern.permute.xlu0 0
        %1165 = vperm.xlu0 %1164, %v1135
        %v1166 = vpop.permute.xlu0 %1165
        %1169 = vset.pattern.permute.xlu0 0
        %1170 = vperm.xlu0 %1169, %v1136
        %v1171 = vpop.permute.xlu0 %1170
        %1174 = vset.pattern.permute.xlu0 0
        %1175 = vperm.xlu0 %1174, %v1137
        %v1176 = vpop.permute.xlu0 %1175
        %1179 = vset.pattern.permute.xlu0 0
        %1180 = vperm.xlu0 %1179, %v1138
        %v1181 = vpop.permute.xlu0 %1180
        %1184 = vset.pattern.permute.xlu0 0
        %1185 = vperm.xlu0 %1184, %v1139
        %v1186 = vpop.permute.xlu0 %1185
        %1189 = vset.pattern.permute.xlu0 0
        %1190 = vperm.xlu0 %1189, %v1140
        %v1191 = vpop.permute.xlu0 %1190
        %1194 = vset.pattern.permute.xlu0 0
        %1195 = vperm.xlu0 %1194, %v1141
        %v1196 = vpop.permute.xlu0 %1195
        %1199 = vset.pattern.permute.xlu0 0
        %1200 = vperm.xlu0 %1199, %v1142
        %v1201 = vpop.permute.xlu0 %1200
        %1204 = vset.pattern.permute.xlu0 0
        %1205 = vperm.xlu0 %1204, %v1143
        %v1206 = vpop.permute.xlu0 %1205
        %1209 = vset.pattern.permute.xlu0 0
        %1210 = vperm.xlu0 %1209, %v1144
        %v1211 = vpop.permute.xlu0 %1210
        %1214 = vset.pattern.permute.xlu0 0
        %1215 = vperm.xlu0 %1214, %v1145
        %v1216 = vpop.permute.xlu0 %1215
        %1219 = vset.pattern.permute.xlu0 0
        %1220 = vperm.xlu0 %1219, %v1146
        %v1221 = vpop.permute.xlu0 %1220
        %1224 = vset.pattern.permute.xlu0 0
        %1225 = vperm.xlu0 %1224, %v1147
        %v1226 = vpop.permute.xlu0 %1225
        %v1228 = vmul.f32 %v374, %v1151
        %v1229 = vmul.f32 %v375, %v1151
        %v1230 = vmul.f32 %v376, %v1156
        %v1231 = vmul.f32 %v377, %v1156
        %v1232 = vmul.f32 %v378, %v1161
        %v1233 = vmul.f32 %v379, %v1161
        %v1234 = vmul.f32 %v380, %v1166
        %v1235 = vmul.f32 %v381, %v1166
        %v1236 = vmul.f32 %v382, %v1171
        %v1237 = vmul.f32 %v383, %v1171
        %v1238 = vmul.f32 %v384, %v1176
        %v1239 = vmul.f32 %v385, %v1176
        %v1240 = vmul.f32 %v386, %v1181
        %v1241 = vmul.f32 %v387, %v1181
        %v1242 = vmul.f32 %v388, %v1186
        %v1243 = vmul.f32 %v389, %v1186
        %v1244 = vmul.f32 %v390, %v1191
        %v1245 = vmul.f32 %v391, %v1191
        %v1246 = vmul.f32 %v392, %v1196
        %v1247 = vmul.f32 %v393, %v1196
        %v1248 = vmul.f32 %v394, %v1201
        %v1249 = vmul.f32 %v395, %v1201
        %v1250 = vmul.f32 %v396, %v1206
        %v1251 = vmul.f32 %v397, %v1206
        %v1252 = vmul.f32 %v398, %v1211
        %v1253 = vmul.f32 %v399, %v1211
        %v1254 = vmul.f32 %v400, %v1216
        %v1255 = vmul.f32 %v401, %v1216
        %v1256 = vmul.f32 %v402, %v1221
        %v1257 = vmul.f32 %v403, %v1221
        %v1258 = vmul.f32 %v404, %v1226
        %v1259 = vmul.f32 %v405, %v1226
        %v1260 = vadd.f32 %v1228, %v1230
        %v1261 = vadd.f32 %v1260, %v1232
        %v1262 = vadd.f32 %v1261, %v1234
        %v1263 = vadd.f32 %v1262, %v1236
        %v1264 = vadd.f32 %v1263, %v1238
        %v1265 = vadd.f32 %v1264, %v1240
        %v1266 = vadd.f32 %v1265, %v1242
        %v1267 = vrot.slane %v1266, 4
        %v1268 = vadd.f32 %v1266, %v1267
        %v1269 = vrot.slane %v1268, 2
        %v1270 = vadd.f32 %v1268, %v1269
        %v1271 = vrot.slane %v1270, 1
        %v1272 = vadd.f32 %v1270, %v1271
        %v1273 = vadd.f32 %v1229, %v1231
        %v1274 = vadd.f32 %v1273, %v1233
        %v1275 = vadd.f32 %v1274, %v1235
        %v1276 = vadd.f32 %v1275, %v1237
        %v1277 = vadd.f32 %v1276, %v1239
        %v1278 = vadd.f32 %v1277, %v1241
        %v1279 = vadd.f32 %v1278, %v1243
        %v1280 = vrot.slane %v1279, 4
        %v1281 = vadd.f32 %v1279, %v1280
        %v1282 = vrot.slane %v1281, 2
        %v1283 = vadd.f32 %v1281, %v1282
        %v1284 = vrot.slane %v1283, 1
        %v1285 = vadd.f32 %v1283, %v1284
        %v1286 = vadd.f32 %v1244, %v1246
        %v1287 = vadd.f32 %v1286, %v1248
        %v1288 = vadd.f32 %v1287, %v1250
        %v1289 = vadd.f32 %v1288, %v1252
        %v1290 = vadd.f32 %v1289, %v1254
        %v1291 = vadd.f32 %v1290, %v1256
        %v1292 = vadd.f32 %v1291, %v1258
        %v1293 = vrot.slane %v1292, 4
        %v1294 = vadd.f32 %v1292, %v1293
        %v1295 = vrot.slane %v1294, 2
        %v1296 = vadd.f32 %v1294, %v1295
        %v1297 = vrot.slane %v1296, 1
        %v1298 = vadd.f32 %v1296, %v1297
        %v1299 = vadd.f32 %v1245, %v1247
        %v1300 = vadd.f32 %v1299, %v1249
        %v1301 = vadd.f32 %v1300, %v1251
        %v1302 = vadd.f32 %v1301, %v1253
        %v1303 = vadd.f32 %v1302, %v1255
        %v1304 = vadd.f32 %v1303, %v1257
        %v1305 = vadd.f32 %v1304, %v1259
        %v1306 = vrot.slane %v1305, 4
        %v1307 = vadd.f32 %v1305, %v1306
        %v1308 = vrot.slane %v1307, 2
        %v1309 = vadd.f32 %v1307, %v1308
        %v1310 = vrot.slane %v1309, 1
        %v1311 = vadd.f32 %v1309, %v1310
        %v1316 = vcombine.low %v1272, %v1285
        %v1318 = vunpack.c.l.s4 1983009808
        %v1319 = vunpack.c.0.s8 %v1318
        %v1320 = vlaneseq
        %v1321 = vshrl.u32 %v1320, 7
        %v1322 = vsub.s32 %v1319, %v1321
        %v1323 = vrot.slane %v1316, %v1322
        %v1324 = vcombine.low %v1298, %v1311
        %v1326 = vunpack.c.l.s4 1983009808
        %v1327 = vunpack.c.0.s8 %v1326
        %v1328 = vlaneseq
        %v1329 = vshrl.u32 %v1328, 7
        %v1330 = vsub.s32 %v1327, %v1329
        %v1331 = vrot.slane %v1324, %v1330
        %vm1332 = vcmask 1044484
        %v1333 = vsel %vm1332, %v1323, %v1323
        %vm1334 = vcmask 1046534
        %v1335 = vsel %vm1334, %v1323, %v1333
        %v1336 = vrot.slane %v1331, 7
        %v1337 = vsel %vm907, %v1336, %v1335
        %vm1338 = vcmask 1043459
        %v1339 = vsel %vm1338, %v1336, %v1337
        %vm1340 = vcmask 1045509
        %v1341 = vsel %vm1340, %v1336, %v1339
        %vm1342 = vcmask 1047559
        %v1343 = vsel %vm1342, %v1336, %v1341
        %1345 = vst [vmem:[%s366] sm:$0xf] %v1343
        %v1346 = vlaneseq
        %v1347 = vshrl.u32 %v1346, 7
        %v1348 = vsub.s32 %v814, %v1347
        %v1349 = vrot.slane %v1151, %v1348
        %v1350 = vlaneseq
        %v1351 = vshrl.u32 %v1350, 7
        %v1352 = vsub.s32 %v819, %v1351
        %v1353 = vrot.slane %v1156, %v1352
        %v1354 = vsel %vm824, %v1353, %v1349
        %v1355 = vlaneseq
        %v1356 = vshrl.u32 %v1355, 7
        %v1357 = vsub.s32 %v826, %v1356
        %v1358 = vrot.slane %v1161, %v1357
        %v1359 = vsel %vm831, %v1358, %v1354
        %v1360 = vlaneseq
        %v1361 = vshrl.u32 %v1360, 7
        %v1362 = vsub.s32 %v833, %v1361
        %v1363 = vrot.slane %v1166, %v1362
        %v1364 = vsel %vm838, %v1363, %v1359
        %v1365 = vlaneseq
        %v1366 = vshrl.u32 %v1365, 7
        %v1367 = vsub.s32 %v840, %v1366
        %v1368 = vrot.slane %v1171, %v1367
        %v1369 = vsel %vm845, %v1368, %v1364
        %v1370 = vlaneseq
        %v1371 = vshrl.u32 %v1370, 7
        %v1372 = vsub.s32 %v847, %v1371
        %v1373 = vrot.slane %v1176, %v1372
        %v1374 = vsel %vm852, %v1373, %v1369
        %v1375 = vlaneseq
        %v1376 = vshrl.u32 %v1375, 7
        %v1377 = vsub.s32 %v854, %v1376
        %v1378 = vrot.slane %v1181, %v1377
        %v1379 = vsel %vm859, %v1378, %v1374
        %v1380 = vlaneseq
        %v1381 = vshrl.u32 %v1380, 7
        %v1382 = vsub.s32 %v861, %v1381
        %v1383 = vrot.slane %v1186, %v1382
        %v1384 = vsel %vm866, %v1383, %v1379
        %v1385 = vlaneseq
        %v1386 = vshrl.u32 %v1385, 7
        %v1387 = vsub.s32 %v814, %v1386
        %v1388 = vrot.slane %v1191, %v1387
        %v1389 = vlaneseq
        %v1390 = vshrl.u32 %v1389, 7
        %v1391 = vsub.s32 %v819, %v1390
        %v1392 = vrot.slane %v1196, %v1391
        %v1393 = vsel %vm824, %v1392, %v1388
        %v1394 = vlaneseq
        %v1395 = vshrl.u32 %v1394, 7
        %v1396 = vsub.s32 %v826, %v1395
        %v1397 = vrot.slane %v1201, %v1396
        %v1398 = vsel %vm831, %v1397, %v1393
        %v1399 = vlaneseq
        %v1400 = vshrl.u32 %v1399, 7
        %v1401 = vsub.s32 %v833, %v1400
        %v1402 = vrot.slane %v1206, %v1401
        %v1403 = vsel %vm838, %v1402, %v1398
        %v1404 = vlaneseq
        %v1405 = vshrl.u32 %v1404, 7
        %v1406 = vsub.s32 %v840, %v1405
        %v1407 = vrot.slane %v1211, %v1406
        %v1408 = vsel %vm845, %v1407, %v1403
        %v1409 = vlaneseq
        %v1410 = vshrl.u32 %v1409, 7
        %v1411 = vsub.s32 %v847, %v1410
        %v1412 = vrot.slane %v1216, %v1411
        %v1413 = vsel %vm852, %v1412, %v1408
        %v1414 = vlaneseq
        %v1415 = vshrl.u32 %v1414, 7
        %v1416 = vsub.s32 %v854, %v1415
        %v1417 = vrot.slane %v1221, %v1416
        %v1418 = vsel %vm859, %v1417, %v1413
        %v1419 = vlaneseq
        %v1420 = vshrl.u32 %v1419, 7
        %v1421 = vsub.s32 %v861, %v1420
        %v1422 = vrot.slane %v1226, %v1421
        %v1423 = vsel %vm866, %v1422, %v1418
        %v1424 = vsel %vm907, %v1423, %v1384
        %1426 = vst.msk [vmem:[%s373] sm:$0x3] %vm910, %v1424
        %s1427 = sand.u32 %s176, 1
        %s1428 = scalar_lea.sflag [#allocation4], %s1427
        %s1429 = sand.u32 %s176, 1
        %s1430 = smul.addr %s1429, 4
        %s1431 = scalar_lea.vmem [#allocation10], %s1430
        %s1432 = sand.u32 %s202, 1
        %s1433 = scalar_lea.sflag [#allocation12], %s1432
        %s1434 = sand.u32 %s202, 1
        %s1435 = smul.addr %s1434, 2
        %s1436 = scalar_lea.vmem [#allocation11], %s1435
        // Predicated region
        $region61: #{tpu_custom_call.1} parent=43 // pred_check
          %p1437 = pneg %p186
        $region62: #{tpu_custom_call.1} parent=43 // pred_check_branch
          %1439 = sbr.rel (%p1437) target = $region64
        $region63: #{tpu_custom_call.1} parent=43 // pred_region
          %s1441 = ssub.s32 64, 64
          %1442 = vsyncadd %s1428, %s1441
          %s1443 = smul.addr %s32, 2
          %s1444 = smul.addr %s1443, 32
          %s1445 = scalar_lea.hbm %s6, %s1444
          %s1447 = sshll.u32 %s1431, 4
          %s1448 = int_to_ptr.vmem [resolvable:$true] %s1447
          %1450 = dma.vmem_to_hbm [thread:$0]  %s1448, 64, %s1445, %s1428
        $region64: #{tpu_custom_call.1} parent=43 // pred_fallthru
          _
        // Predicated region
        $region65: #{tpu_custom_call.1} parent=43 // pred_check
          %p1451 = pneg %p212
        $region66: #{tpu_custom_call.1} parent=43 // pred_check_branch
          %1453 = sbr.rel (%p1451) target = $region68
        $region67: #{tpu_custom_call.1} parent=43 // pred_region
          %s1455 = ssub.s32 32, 32
          %1456 = vsyncadd %s1433, %s1455
          %s1457 = smul.addr %s32, 32
          %s1458 = scalar_lea.hbm %s7, %s1457
          %s1460 = sshll.u32 %s1436, 4
          %s1461 = int_to_ptr.vmem [resolvable:$true] %s1460
          %1463 = dma.vmem_to_hbm [thread:$0]  %s1461, 32, %s1458, %s1433
        $region68: #{tpu_custom_call.1} parent=43 // pred_fallthru
          _
      $region44: #{tpu_custom_call.1} parent=5 // pred_fallthru
        _
      %p1464 = scmp.le.s32.totalorder 2, %s27
      // Predicated region
      $region69: #{tpu_custom_call.1} parent=5 // pred_check
        %p1465 = pneg %p1464
      $region70: #{tpu_custom_call.1} parent=5 // pred_check_branch
        %1467 = sbr.rel (%p1465) target = $region72
      $region71: #{tpu_custom_call.1} parent=5 // pred_region
        %s1468 = ssub.s32 %s27, 2
        // Predicated region
        $region73: #{tpu_custom_call.1} parent=71 // pred_check
          %p1469 = pneg %p192
        $region74: #{tpu_custom_call.1} parent=71 // pred_check_branch
          %1471 = sbr.rel (%p1469) target = $region76
        $region75: #{tpu_custom_call.1} parent=71 // pred_region
          %s1472 = sand.u32 %s177, 1
          %s1473 = scalar_lea.sflag [#allocation4], %s1472
          %s1474 = sand.u32 %s177, 1
          %s1475 = smul.addr %s1474, 4
          %s1476 = scalar_lea.vmem [#allocation10], %s1475
          %1477 = dma.done %s1473, 64
        $region76: #{tpu_custom_call.1} parent=71 // pred_fallthru
          _
        // Predicated region
        $region77: #{tpu_custom_call.1} parent=71 // pred_check
          %p1478 = pneg %p218
        $region78: #{tpu_custom_call.1} parent=71 // pred_check_branch
          %1480 = sbr.rel (%p1478) target = $region80
        $region79: #{tpu_custom_call.1} parent=71 // pred_region
          %s1481 = sand.u32 %s203, 1
          %s1482 = scalar_lea.sflag [#allocation12], %s1481
          %s1483 = sand.u32 %s203, 1
          %s1484 = smul.addr %s1483, 2
          %s1485 = scalar_lea.vmem [#allocation11], %s1484
          %1486 = dma.done %s1482, 32
        $region80: #{tpu_custom_call.1} parent=71 // pred_fallthru
          _
      $region72: #{tpu_custom_call.1} parent=5 // pred_fallthru
        _
    $region6: #{tpu_custom_call.1} parent=1 // loop_footer
      %s31 = sadd.s32 1, %s27
    $region7: #{tpu_custom_call.1} parent=1 // loop_footer_branch
      %26 = sbr.rel target = $region3
    $region8: #{tpu_custom_call.1} parent=1 // loop_exit
      _
    %1487 = vsyncpa [#allocation3], 1
    %s1488 = scalar_lea.sflag [#allocation3], 1
    %1489 = vsyncpa %s1488, 1
    %1490 = vsyncpa [#allocation6], 1
    %s1491 = scalar_lea.sflag [#allocation6], 1
    %1492 = vsyncpa %s1491, 1
    %1493 = vsyncpa [#allocation9], 1
    %1494 = vsyncpa [#allocation4], 1
    %s1495 = scalar_lea.sflag [#allocation4], 1
    %1496 = vsyncpa %s1495, 1
    %1497 = vsyncpa [#allocation12], 1
    %s1498 = scalar_lea.sflag [#allocation12], 1
    %1499 = vsyncpa %s1498, 1

</llo_original>
